<compile_context>
chip_gen: v7x
topology: tpu7x:2x2x1
jax: 0.10.0
libtpu: 0.0.40
codegen_flags: <defaults>
</compile_context>

<pallas_src>
import functools

import jax
import jax.numpy as jnp
from jax import lax
from jax.experimental import pallas as pl
from jax.experimental.pallas import tpu as pltpu


# Rows of the packed (6, E) per-feature vector slab.
_BO, _G1, _B1N, _B2, _G2, _B2N = range(6)


def _layernorm(v, g, b, eps=1e-5):
    mu = jnp.mean(v, axis=-1, keepdims=True)
    var = jnp.mean((v - mu) ** 2, axis=-1, keepdims=True)
    return (v - mu) * lax.rsqrt(var + eps) * g + b


def encoder_block_kernel(x_ref, wqkv_ref, bqkv_ref, wo_ref, w1_ref, b1_ref,
                         w2_ref, vecs_ref, o_ref, attn_slab, *, num_heads):
    """One grid step = one batch element's (S, E) token slab."""
    E = x_ref.shape[-1]
    H = num_heads
    D = E // H
    cdt = wqkv_ref.dtype                       # matmul operand dtype (bf16 / f32)

    x = x_ref[...].astype(jnp.float32)         # (S, E); residual path stays f32
    xc = x.astype(cdt)

    # ---- fused QKV projection: one lane-dense (S,E) @ (E,3E) matmul --------
    # 1/sqrt(D) is folded into the Q columns of wqkv/bqkv in the wrapper.
    qkv = jnp.dot(xc, wqkv_ref[...], preferred_element_type=jnp.float32)
    qkv = qkv + bqkv_ref[...]                  # (S, 3E) f32

    # ---- per-head attention at (S, S); no batch-folded mask ----------------
    # TODO(synk): lax.fori_loop over heads + flash-style KV tiling at large H/S.
    for h in range(H):                         # static slices of the QKV result
        qh = qkv[:, h * D:(h + 1) * D].astype(cdt)
        kh = qkv[:, E + h * D:E + (h + 1) * D].astype(cdt)
        vh = qkv[:, 2 * E + h * D:2 * E + (h + 1) * D].astype(cdt)
        # scores: contract the last dims of q and k (no explicit transpose)
        s = lax.dot_general(qh, kh, (((1,), (1,)), ((), ())),
                            preferred_element_type=jnp.float32)       # (S, S)
        s = s - jnp.max(s, axis=-1, keepdims=True)
        p = jnp.exp(s)                                                 # f32
        denom = jnp.sum(p, axis=-1, keepdims=True)                     # f32
        oh = jnp.dot(p.astype(cdt), vh,
                     preferred_element_type=jnp.float32) / denom       # (S, D)
        # concatenate heads by writing this head's lane slice of the VMEM slab
        attn_slab[:, h * D:(h + 1) * D] = oh.astype(cdt)

    # ---- single head-concatenated out-projection: (S,E) @ (E,E) ------------
    attn = jnp.dot(attn_slab[...], wo_ref[...],
                   preferred_element_type=jnp.float32)
    attn = attn + vecs_ref[_BO:_BO + 1, :]
    # attn dropout: identity in eval mode.

    # residual + LayerNorm (attention block), f32 statistics
    x1 = _layernorm(x + attn,
                    vecs_ref[_G1:_G1 + 1, :], vecs_ref[_B1N:_B1N + 1, :])

    # ---- MLP block ----------------------------------------------------------
    h1 = jnp.dot(x1.astype(cdt), w1_ref[...],
                 preferred_element_type=jnp.float32) + b1_ref[...]
    # exact (erf-based) GELU, matching PyTorch nn.GELU() default
    h1 = 0.5 * h1 * (1.0 + lax.erf(h1 * 0.7071067811865476))
    mlp = jnp.dot(h1.astype(cdt), w2_ref[...],
                  preferred_element_type=jnp.float32) + vecs_ref[_B2:_B2 + 1, :]
    # mlp dropout: identity in eval mode.

    # residual + LayerNorm (MLP block)
    o_ref[...] = _layernorm(x1 + mlp, vecs_ref[_G2:_G2 + 1, :],
                            vecs_ref[_B2N:_B2N + 1, :]).astype(o_ref.dtype)


def _prepare_params(params, num_heads, compute_dtype):
    """Fuse QKV, fold the 1/sqrt(D) scale, pack tiny vectors, cast weights."""
    E = params['wq'].shape[0]
    assert E % num_heads == 0, "embedding_dim must be divisible by num_heads"
    D = E // num_heads
    scale = 1.0 / jnp.sqrt(jnp.float32(D))

    wqkv = jnp.concatenate([params['wq'] * scale, params['wk'], params['wv']],
                           axis=1).astype(compute_dtype)       # (E, 3E)
    bqkv = jnp.concatenate([params['bq'] * scale, params['bk'], params['bv']],
                           axis=1).astype(jnp.float32)         # (1, 3E), f32 add
    wo = params['wo'].astype(compute_dtype)                    # (E, E)
    w1 = params['w1'].astype(compute_dtype)                    # (E, M)
    w2 = params['w2'].astype(compute_dtype)                    # (M, E)
    b1 = params['b1'].astype(jnp.float32)                      # (1, M)
    vecs = jnp.concatenate([params['bo'], params['g1'], params['b1n'],
                            params['b2'], params['g2'], params['b2n']],
                           axis=0).astype(jnp.float32)         # (6, E)
    return wqkv, bqkv, wo, w1, b1, w2, vecs


def transformer_encoder_block(x_sbe, params, num_heads,
                              compute_dtype=jnp.bfloat16):
    """x_sbe: (S, B, E) float32 (PyTorch batch_first=False). Returns (S, B, E)."""
    S, B, E = x_sbe.shape
    # One cheap wrapper transpose so attention runs per batch at (S, S)
    # instead of a batch-folded (S*B, S*B) score matmul + additive mask.
    x_bse = jnp.transpose(x_sbe, (1, 0, 2))                    # (B, S, E)

    wqkv, bqkv, wo, w1, b1, w2, vecs = _prepare_params(params, num_heads,
                                                       compute_dtype)
    weights = (wqkv, bqkv, wo, w1, b1, w2, vecs)

    def resident(a):
        # Full-array block, constant index map -> VMEM-resident across steps.
        nd = a.ndim
        return pl.BlockSpec(a.shape, lambda b: (0,) * nd)

    kernel = functools.partial(encoder_block_kernel, num_heads=num_heads)

    out = pl.pallas_call(
        kernel,
        out_shape=jax.ShapeDtypeStruct((B, S, E), jnp.float32),
        grid=(B,),
        in_specs=[pl.BlockSpec((None, S, E), lambda b: (b, 0, 0))]
                 + [resident(a) for a in weights],
        out_specs=pl.BlockSpec((None, S, E), lambda b: (b, 0, 0)),
        scratch_shapes=[pltpu.VMEM((S, E), compute_dtype)],    # head-concat slab
        compiler_params=pltpu.CompilerParams(
            dimension_semantics=("parallel",),                 # megacore on v7x
            vmem_limit_bytes=32 * 1024 * 1024),
    )(x_bse, *weights)

    return jnp.transpose(out, (1, 0, 2))                       # back to (S, B, E)


def ref_forward(x_sbe, p, num_heads):
    """Pure-JAX reference of the PyTorch forward (eval mode)."""
    S, B, E = x_sbe.shape
    D = E // num_heads
    x = jnp.transpose(x_sbe, (1, 0, 2))            # (B, S, E)
    q = x @ p['wq'] + p['bq']
    k = x @ p['wk'] + p['bk']
    v = x @ p['wv'] + p['bv']
    qh = q.reshape(B, S, num_heads, D).transpose(0, 2, 1, 3)
    kh = k.reshape(B, S, num_heads, D).transpose(0, 2, 1, 3)
    vh = v.reshape(B, S, num_heads, D).transpose(0, 2, 1, 3)
    s = jnp.einsum('bhqd,bhkd->bhqk', qh, kh) / jnp.sqrt(jnp.float32(D))
    a = jax.nn.softmax(s, axis=-1)
    o = jnp.einsum('bhqk,bhkd->bhqd', a, vh).transpose(0, 2, 1, 3)
    attn = o.reshape(B, S, E) @ p['wo'] + p['bo']

    def ln(v_, g, b):
        mu = v_.mean(-1, keepdims=True)
        var = ((v_ - mu) ** 2).mean(-1, keepdims=True)
        return (v_ - mu) / jnp.sqrt(var + 1e-5) * g + b

    x1 = ln(x + attn, p['g1'], p['b1n'])
    h = x1 @ p['w1'] + p['b1']
    h = 0.5 * h * (1.0 + jax.scipy.special.erf(h / jnp.sqrt(2.0)))
    mlp = h @ p['w2'] + p['b2']
    out = ln(x1 + mlp, p['g2'], p['b2n'])
    return jnp.transpose(out, (1, 0, 2))


def make_params(key, embedding_dim, num_heads, mlp_size):
    E, M = embedding_dim, mlp_size
    ks = jax.random.split(key, 12)

    def w(k, shape):
        return (0.02 * jax.random.normal(k, shape)).astype(jnp.float32)

    return {
        # attention in-projection (stored (in, out); y = x @ W + b)
        'wq': w(ks[0], (E, E)), 'bq': w(ks[1], (1, E)),
        'wk': w(ks[2], (E, E)), 'bk': w(ks[3], (1, E)),
        'wv': w(ks[4], (E, E)), 'bv': w(ks[5], (1, E)),
        # attention out-projection
        'wo': w(ks[6], (E, E)), 'bo': w(ks[7], (1, E)),
        # LayerNorm after attention
        'g1': jnp.ones((1, E), jnp.float32), 'b1n': jnp.zeros((1, E), jnp.float32),
        # MLP
        'w1': w(ks[8], (E, M)), 'b1': w(ks[9], (1, M)),
        'w2': w(ks[10], (M, E)), 'b2': w(ks[11], (1, E)),
        # LayerNorm after MLP
        'g2': jnp.ones((1, E), jnp.float32), 'b2n': jnp.zeros((1, E), jnp.float32),
    }


if __name__ == "__main__":
    # small shapes consistent with the module: seq=8, batch=2, embed=32,
    # heads=4, mlp_size=64
    S, B, E, H, M = 8, 2, 32, 4, 64

    key = jax.random.PRNGKey(0)
    kx, kp = jax.random.split(key)
    x = jax.random.normal(kx, (S, B, E), dtype=jnp.float32)   # (seq, batch, embed)
    params = make_params(kp, E, H, M)

    ref = jax.block_until_ready(ref_forward(x, params, num_heads=H))

    # f32 operand path: tight check of the kernel's semantics.
    out_f32 = jax.block_until_ready(
        transformer_encoder_block(x, params, num_heads=H,
                                  compute_dtype=jnp.float32))
    assert out_f32.shape == (S, B, E)
    assert jnp.allclose(out_f32, ref, atol=5e-4, rtol=5e-4), (
        f"f32 path max abs err {jnp.max(jnp.abs(out_f32 - ref))}")

    # bf16 operand path (default / fast): looser, bf16-appropriate tolerance.
    out_bf16 = jax.block_until_ready(
        transformer_encoder_block(x, params, num_heads=H,
                                  compute_dtype=jnp.bfloat16))
    assert out_bf16.shape == (S, B, E)
    assert jnp.allclose(out_bf16, ref, atol=1e-2, rtol=1e-2), (
        f"bf16 path max abs err {jnp.max(jnp.abs(out_bf16 - ref))}")

    print("KERNEL_OK")
</pallas_src>

<mosaic_0001>
module attributes {stable_mosaic.version = 11 : i64} {
  func.func @encoder_block_kernel(%arg0: i32, %arg1: memref<1x8x32xf32, #tpu.memory_space<vmem>>, %arg2: memref<32x96xf32, #tpu.memory_space<vmem>>, %arg3: memref<1x96xf32, #tpu.memory_space<vmem>>, %arg4: memref<32x32xf32, #tpu.memory_space<vmem>>, %arg5: memref<32x64xf32, #tpu.memory_space<vmem>>, %arg6: memref<1x64xf32, #tpu.memory_space<vmem>>, %arg7: memref<64x32xf32, #tpu.memory_space<vmem>>, %arg8: memref<6x32xf32, #tpu.memory_space<vmem>>, %arg9: memref<1x8x32xf32, #tpu.memory_space<vmem>>, %arg10: memref<8x32xf32, #tpu.memory_space<vmem>>) attributes {dimension_semantics = [#tpu.dimension_semantics<parallel>], iteration_bounds = array<i64: 2>, scalar_prefetch = 0 : i64, scratch_operands = 1 : i64, tpu.core_type = #tpu.core_type<tc>, window_params = [{transform_indices = @transform_0, window_bounds = array<i64: 1, 8, 32>}, {pipeline_mode = #tpu.pipeline_mode<synchronous>, transform_indices = @transform_1, window_bounds = array<i64: 32, 96>}, {pipeline_mode = #tpu.pipeline_mode<synchronous>, transform_indices = @transform_2, window_bounds = array<i64: 1, 96>}, {pipeline_mode = #tpu.pipeline_mode<synchronous>, transform_indices = @transform_3, window_bounds = array<i64: 32, 32>}, {pipeline_mode = #tpu.pipeline_mode<synchronous>, transform_indices = @transform_4, window_bounds = array<i64: 32, 64>}, {pipeline_mode = #tpu.pipeline_mode<synchronous>, transform_indices = @transform_5, window_bounds = array<i64: 1, 64>}, {pipeline_mode = #tpu.pipeline_mode<synchronous>, transform_indices = @transform_6, window_bounds = array<i64: 64, 32>}, {pipeline_mode = #tpu.pipeline_mode<synchronous>, transform_indices = @transform_7, window_bounds = array<i64: 6, 32>}, {transform_indices = @transform_8, window_bounds = array<i64: 1, 8, 32>}]} {
    %c0 = arith.constant 0 : index
    %c0_0 = arith.constant 0 : index
    %c0_1 = arith.constant 0 : index
    %0 = vector.load %arg1[%c0, %c0_0, %c0_1] : memref<1x8x32xf32, #tpu.memory_space<vmem>>, vector<1x8x32xf32>
    %1 = vector.shape_cast %0 : vector<1x8x32xf32> to vector<8x32xf32>
    %c0_2 = arith.constant 0 : index
    %c0_3 = arith.constant 0 : index
    %2 = vector.load %arg2[%c0_2, %c0_3] : memref<32x96xf32, #tpu.memory_space<vmem>>, vector<32x96xf32>
    %cst = arith.constant dense<0.000000e+00> : vector<8x96xf32>
    %3 = tpu.matmul %1, %2, %cst {dimension_numbers = #tpu.dot_dimension_numbers<[1], [0], [0], [1], [0, 0, 1, 1], [], []>} : vector<8x32xf32>, vector<32x96xf32>, vector<8x96xf32> -> vector<8x96xf32>
    %c0_4 = arith.constant 0 : index
    %c0_5 = arith.constant 0 : index
    %4 = vector.load %arg3[%c0_4, %c0_5] : memref<1x96xf32, #tpu.memory_space<vmem>>, vector<1x96xf32>
    %5 = vector.broadcast %4 : vector<1x96xf32> to vector<8x96xf32>
    %6 = arith.addf %3, %5 : vector<8x96xf32>
    %7 = vector.extract_strided_slice %6 {offsets = [0, 0], sizes = [8, 8], strides = [1, 1]} : vector<8x96xf32> to vector<8x8xf32>
    %8 = vector.extract_strided_slice %6 {offsets = [0, 32], sizes = [8, 8], strides = [1, 1]} : vector<8x96xf32> to vector<8x8xf32>
    %9 = vector.extract_strided_slice %6 {offsets = [0, 64], sizes = [8, 8], strides = [1, 1]} : vector<8x96xf32> to vector<8x8xf32>
    %cst_6 = arith.constant dense<0.000000e+00> : vector<8x8xf32>
    %10 = tpu.matmul %7, %8, %cst_6 {dimension_numbers = #tpu.dot_dimension_numbers<[1], [1], [0], [0], [0, 0, 1, 0], [], []>} : vector<8x8xf32>, vector<8x8xf32>, vector<8x8xf32> -> vector<8x8xf32>
    %cst_7 = arith.constant dense<0xFF800000> : vector<8xf32>
    %11 = vector.multi_reduction <maximumf>, %10, %cst_7 [1] : vector<8x8xf32> to vector<8xf32>
    %12 = vector.shape_cast %11 : vector<8xf32> to vector<8x1xf32>
    %13 = vector.broadcast %12 : vector<8x1xf32> to vector<8x8xf32>
    %14 = arith.subf %10, %13 : vector<8x8xf32>
    %15 = math.exp %14 : vector<8x8xf32>
    %cst_8 = arith.constant dense<0.000000e+00> : vector<8xf32>
    %16 = vector.multi_reduction <add>, %15, %cst_8 [1] : vector<8x8xf32> to vector<8xf32>
    %17 = vector.shape_cast %16 : vector<8xf32> to vector<8x1xf32>
    %cst_9 = arith.constant dense<0.000000e+00> : vector<8x8xf32>
    %18 = tpu.matmul %15, %9, %cst_9 {dimension_numbers = #tpu.dot_dimension_numbers<[1], [0], [0], [1], [0, 0, 1, 1], [], []>} : vector<8x8xf32>, vector<8x8xf32>, vector<8x8xf32> -> vector<8x8xf32>
    %19 = vector.broadcast %17 : vector<8x1xf32> to vector<8x8xf32>
    %20 = arith.divf %18, %19 : vector<8x8xf32>
    %c0_10 = arith.constant 0 : index
    %c0_11 = arith.constant 0 : index
    %21 = vector.load %arg10[%c0_10, %c0_11] : memref<8x32xf32, #tpu.memory_space<vmem>>, vector<8x8xf32>
    tpu.vector_store %arg10[%c0_10, %c0_11], %20 {strides = array<i32>} : memref<8x32xf32, #tpu.memory_space<vmem>>, vector<8x8xf32>,
    %22 = vector.extract_strided_slice %6 {offsets = [0, 8], sizes = [8, 8], strides = [1, 1]} : vector<8x96xf32> to vector<8x8xf32>
    %23 = vector.extract_strided_slice %6 {offsets = [0, 40], sizes = [8, 8], strides = [1, 1]} : vector<8x96xf32> to vector<8x8xf32>
    %24 = vector.extract_strided_slice %6 {offsets = [0, 72], sizes = [8, 8], strides = [1, 1]} : vector<8x96xf32> to vector<8x8xf32>
    %cst_12 = arith.constant dense<0.000000e+00> : vector<8x8xf32>
    %25 = tpu.matmul %22, %23, %cst_12 {dimension_numbers = #tpu.dot_dimension_numbers<[1], [1], [0], [0], [0, 0, 1, 0], [], []>} : vector<8x8xf32>, vector<8x8xf32>, vector<8x8xf32> -> vector<8x8xf32>
    %cst_13 = arith.constant dense<0xFF800000> : vector<8xf32>
    %26 = vector.multi_reduction <maximumf>, %25, %cst_13 [1] : vector<8x8xf32> to vector<8xf32>
    %27 = vector.shape_cast %26 : vector<8xf32> to vector<8x1xf32>
    %28 = vector.broadcast %27 : vector<8x1xf32> to vector<8x8xf32>
    %29 = arith.subf %25, %28 : vector<8x8xf32>
    %30 = math.exp %29 : vector<8x8xf32>
    %cst_14 = arith.constant dense<0.000000e+00> : vector<8xf32>
    %31 = vector.multi_reduction <add>, %30, %cst_14 [1] : vector<8x8xf32> to vector<8xf32>
    %32 = vector.shape_cast %31 : vector<8xf32> to vector<8x1xf32>
    %cst_15 = arith.constant dense<0.000000e+00> : vector<8x8xf32>
    %33 = tpu.matmul %30, %24, %cst_15 {dimension_numbers = #tpu.dot_dimension_numbers<[1], [0], [0], [1], [0, 0, 1, 1], [], []>} : vector<8x8xf32>, vector<8x8xf32>, vector<8x8xf32> -> vector<8x8xf32>
    %34 = vector.broadcast %32 : vector<8x1xf32> to vector<8x8xf32>
    %35 = arith.divf %33, %34 : vector<8x8xf32>
    %c0_16 = arith.constant 0 : index
    %c8 = arith.constant 8 : index
    %36 = vector.load %arg10[%c0_16, %c8] : memref<8x32xf32, #tpu.memory_space<vmem>>, vector<8x8xf32>
    tpu.vector_store %arg10[%c0_16, %c8], %35 {strides = array<i32>} : memref<8x32xf32, #tpu.memory_space<vmem>>, vector<8x8xf32>,
    %37 = vector.extract_strided_slice %6 {offsets = [0, 16], sizes = [8, 8], strides = [1, 1]} : vector<8x96xf32> to vector<8x8xf32>
    %38 = vector.extract_strided_slice %6 {offsets = [0, 48], sizes = [8, 8], strides = [1, 1]} : vector<8x96xf32> to vector<8x8xf32>
    %39 = vector.extract_strided_slice %6 {offsets = [0, 80], sizes = [8, 8], strides = [1, 1]} : vector<8x96xf32> to vector<8x8xf32>
    %cst_17 = arith.constant dense<0.000000e+00> : vector<8x8xf32>
    %40 = tpu.matmul %37, %38, %cst_17 {dimension_numbers = #tpu.dot_dimension_numbers<[1], [1], [0], [0], [0, 0, 1, 0], [], []>} : vector<8x8xf32>, vector<8x8xf32>, vector<8x8xf32> -> vector<8x8xf32>
    %cst_18 = arith.constant dense<0xFF800000> : vector<8xf32>
    %41 = vector.multi_reduction <maximumf>, %40, %cst_18 [1] : vector<8x8xf32> to vector<8xf32>
    %42 = vector.shape_cast %41 : vector<8xf32> to vector<8x1xf32>
    %43 = vector.broadcast %42 : vector<8x1xf32> to vector<8x8xf32>
    %44 = arith.subf %40, %43 : vector<8x8xf32>
    %45 = math.exp %44 : vector<8x8xf32>
    %cst_19 = arith.constant dense<0.000000e+00> : vector<8xf32>
    %46 = vector.multi_reduction <add>, %45, %cst_19 [1] : vector<8x8xf32> to vector<8xf32>
    %47 = vector.shape_cast %46 : vector<8xf32> to vector<8x1xf32>
    %cst_20 = arith.constant dense<0.000000e+00> : vector<8x8xf32>
    %48 = tpu.matmul %45, %39, %cst_20 {dimension_numbers = #tpu.dot_dimension_numbers<[1], [0], [0], [1], [0, 0, 1, 1], [], []>} : vector<8x8xf32>, vector<8x8xf32>, vector<8x8xf32> -> vector<8x8xf32>
    %49 = vector.broadcast %47 : vector<8x1xf32> to vector<8x8xf32>
    %50 = arith.divf %48, %49 : vector<8x8xf32>
    %c0_21 = arith.constant 0 : index
    %c16 = arith.constant 16 : index
    %51 = vector.load %arg10[%c0_21, %c16] : memref<8x32xf32, #tpu.memory_space<vmem>>, vector<8x8xf32>
    tpu.vector_store %arg10[%c0_21, %c16], %50 {strides = array<i32>} : memref<8x32xf32, #tpu.memory_space<vmem>>, vector<8x8xf32>,
    %52 = vector.extract_strided_slice %6 {offsets = [0, 24], sizes = [8, 8], strides = [1, 1]} : vector<8x96xf32> to vector<8x8xf32>
    %53 = vector.extract_strided_slice %6 {offsets = [0, 56], sizes = [8, 8], strides = [1, 1]} : vector<8x96xf32> to vector<8x8xf32>
    %54 = vector.extract_strided_slice %6 {offsets = [0, 88], sizes = [8, 8], strides = [1, 1]} : vector<8x96xf32> to vector<8x8xf32>
    %cst_22 = arith.constant dense<0.000000e+00> : vector<8x8xf32>
    %55 = tpu.matmul %52, %53, %cst_22 {dimension_numbers = #tpu.dot_dimension_numbers<[1], [1], [0], [0], [0, 0, 1, 0], [], []>} : vector<8x8xf32>, vector<8x8xf32>, vector<8x8xf32> -> vector<8x8xf32>
    %cst_23 = arith.constant dense<0xFF800000> : vector<8xf32>
    %56 = vector.multi_reduction <maximumf>, %55, %cst_23 [1] : vector<8x8xf32> to vector<8xf32>
    %57 = vector.shape_cast %56 : vector<8xf32> to vector<8x1xf32>
    %58 = vector.broadcast %57 : vector<8x1xf32> to vector<8x8xf32>
    %59 = arith.subf %55, %58 : vector<8x8xf32>
    %60 = math.exp %59 : vector<8x8xf32>
    %cst_24 = arith.constant dense<0.000000e+00> : vector<8xf32>
    %61 = vector.multi_reduction <add>, %60, %cst_24 [1] : vector<8x8xf32> to vector<8xf32>
    %62 = vector.shape_cast %61 : vector<8xf32> to vector<8x1xf32>
    %cst_25 = arith.constant dense<0.000000e+00> : vector<8x8xf32>
    %63 = tpu.matmul %60, %54, %cst_25 {dimension_numbers = #tpu.dot_dimension_numbers<[1], [0], [0], [1], [0, 0, 1, 1], [], []>} : vector<8x8xf32>, vector<8x8xf32>, vector<8x8xf32> -> vector<8x8xf32>
    %64 = vector.broadcast %62 : vector<8x1xf32> to vector<8x8xf32>
    %65 = arith.divf %63, %64 : vector<8x8xf32>
    %c0_26 = arith.constant 0 : index
    %c24 = arith.constant 24 : index
    %66 = vector.load %arg10[%c0_26, %c24] : memref<8x32xf32, #tpu.memory_space<vmem>>, vector<8x8xf32>
    tpu.vector_store %arg10[%c0_26, %c24], %65 {strides = array<i32>} : memref<8x32xf32, #tpu.memory_space<vmem>>, vector<8x8xf32>,
    %c0_27 = arith.constant 0 : index
    %c0_28 = arith.constant 0 : index
    %67 = vector.load %arg10[%c0_27, %c0_28] : memref<8x32xf32, #tpu.memory_space<vmem>>, vector<8x32xf32>
    %c0_29 = arith.constant 0 : index
    %c0_30 = arith.constant 0 : index
    %68 = vector.load %arg4[%c0_29, %c0_30] : memref<32x32xf32, #tpu.memory_space<vmem>>, vector<32x32xf32>
    %cst_31 = arith.constant dense<0.000000e+00> : vector<8x32xf32>
    %69 = tpu.matmul %67, %68, %cst_31 {dimension_numbers = #tpu.dot_dimension_numbers<[1], [0], [0], [1], [0, 0, 1, 1], [], []>} : vector<8x32xf32>, vector<32x32xf32>, vector<8x32xf32> -> vector<8x32xf32>
    %c0_32 = arith.constant 0 : index
    %c0_33 = arith.constant 0 : index
    %70 = vector.load %arg8[%c0_32, %c0_33] : memref<6x32xf32, #tpu.memory_space<vmem>>, vector<1x32xf32>
    %71 = vector.broadcast %70 : vector<1x32xf32> to vector<8x32xf32>
    %72 = arith.addf %69, %71 : vector<8x32xf32>
    %73 = arith.addf %1, %72 : vector<8x32xf32>
    %c1 = arith.constant 1 : index
    %c0_34 = arith.constant 0 : index
    %74 = vector.load %arg8[%c1, %c0_34] : memref<6x32xf32, #tpu.memory_space<vmem>>, vector<1x32xf32>
    %c2 = arith.constant 2 : index
    %c0_35 = arith.constant 0 : index
    %75 = vector.load %arg8[%c2, %c0_35] : memref<6x32xf32, #tpu.memory_space<vmem>>, vector<1x32xf32>
    %cst_36 = arith.constant dense<0.000000e+00> : vector<8xf32>
    %76 = vector.multi_reduction <add>, %73, %cst_36 [1] : vector<8x32xf32> to vector<8xf32>
    %77 = vector.shape_cast %76 : vector<8xf32> to vector<8x1xf32>
    %cst_37 = arith.constant 3.200000e+01 : f32
    %78 = vector.broadcast %cst_37 : f32 to vector<8x1xf32>
    %79 = arith.divf %77, %78 : vector<8x1xf32>
    %80 = vector.broadcast %79 : vector<8x1xf32> to vector<8x32xf32>
    %81 = arith.subf %73, %80 : vector<8x32xf32>
    %82 = arith.mulf %81, %81 : vector<8x32xf32>
    %cst_38 = arith.constant dense<0.000000e+00> : vector<8xf32>
    %83 = vector.multi_reduction <add>, %82, %cst_38 [1] : vector<8x32xf32> to vector<8xf32>
    %84 = vector.shape_cast %83 : vector<8xf32> to vector<8x1xf32>
    %cst_39 = arith.constant 3.200000e+01 : f32
    %85 = vector.broadcast %cst_39 : f32 to vector<8x1xf32>
    %86 = arith.divf %84, %85 : vector<8x1xf32>
    %87 = vector.broadcast %79 : vector<8x1xf32> to vector<8x32xf32>
    %88 = arith.subf %73, %87 : vector<8x32xf32>
    %cst_40 = arith.constant 9.99999974E-6 : f32
    %89 = vector.broadcast %cst_40 : f32 to vector<8x1xf32>
    %90 = arith.addf %86, %89 : vector<8x1xf32>
    %91 = math.rsqrt %90 : vector<8x1xf32>
    %92 = vector.broadcast %91 : vector<8x1xf32> to vector<8x32xf32>
    %93 = arith.mulf %88, %92 : vector<8x32xf32>
    %94 = vector.broadcast %74 : vector<1x32xf32> to vector<8x32xf32>
    %95 = arith.mulf %93, %94 : vector<8x32xf32>
    %96 = vector.broadcast %75 : vector<1x32xf32> to vector<8x32xf32>
    %97 = arith.addf %95, %96 : vector<8x32xf32>
    %c0_41 = arith.constant 0 : index
    %c0_42 = arith.constant 0 : index
    %98 = vector.load %arg5[%c0_41, %c0_42] : memref<32x64xf32, #tpu.memory_space<vmem>>, vector<32x64xf32>
    %cst_43 = arith.constant dense<0.000000e+00> : vector<8x64xf32>
    %99 = tpu.matmul %97, %98, %cst_43 {dimension_numbers = #tpu.dot_dimension_numbers<[1], [0], [0], [1], [0, 0, 1, 1], [], []>} : vector<8x32xf32>, vector<32x64xf32>, vector<8x64xf32> -> vector<8x64xf32>
    %c0_44 = arith.constant 0 : index
    %c0_45 = arith.constant 0 : index
    %100 = vector.load %arg6[%c0_44, %c0_45] : memref<1x64xf32, #tpu.memory_space<vmem>>, vector<1x64xf32>
    %101 = vector.broadcast %100 : vector<1x64xf32> to vector<8x64xf32>
    %102 = arith.addf %99, %101 : vector<8x64xf32>
    %cst_46 = arith.constant 5.000000e-01 : f32
    %103 = vector.broadcast %cst_46 : f32 to vector<8x64xf32>
    %104 = arith.mulf %103, %102 : vector<8x64xf32>
    %cst_47 = arith.constant 0.707106769 : f32
    %105 = vector.broadcast %cst_47 : f32 to vector<8x64xf32>
    %106 = arith.mulf %102, %105 : vector<8x64xf32>
    %107 = math.erf %106 : vector<8x64xf32>
    %cst_48 = arith.constant 1.000000e+00 : f32
    %108 = vector.broadcast %cst_48 : f32 to vector<8x64xf32>
    %109 = arith.addf %108, %107 : vector<8x64xf32>
    %110 = arith.mulf %104, %109 : vector<8x64xf32>
    %c0_49 = arith.constant 0 : index
    %c0_50 = arith.constant 0 : index
    %111 = vector.load %arg7[%c0_49, %c0_50] : memref<64x32xf32, #tpu.memory_space<vmem>>, vector<64x32xf32>
    %cst_51 = arith.constant dense<0.000000e+00> : vector<8x32xf32>
    %112 = tpu.matmul %110, %111, %cst_51 {dimension_numbers = #tpu.dot_dimension_numbers<[1], [0], [0], [1], [0, 0, 1, 1], [], []>} : vector<8x64xf32>, vector<64x32xf32>, vector<8x32xf32> -> vector<8x32xf32>
    %c3 = arith.constant 3 : index
    %c0_52 = arith.constant 0 : index
    %113 = vector.load %arg8[%c3, %c0_52] : memref<6x32xf32, #tpu.memory_space<vmem>>, vector<1x32xf32>
    %114 = vector.broadcast %113 : vector<1x32xf32> to vector<8x32xf32>
    %115 = arith.addf %112, %114 : vector<8x32xf32>
    %116 = arith.addf %97, %115 : vector<8x32xf32>
    %c4 = arith.constant 4 : index
    %c0_53 = arith.constant 0 : index
    %117 = vector.load %arg8[%c4, %c0_53] : memref<6x32xf32, #tpu.memory_space<vmem>>, vector<1x32xf32>
    %c5 = arith.constant 5 : index
    %c0_54 = arith.constant 0 : index
    %118 = vector.load %arg8[%c5, %c0_54] : memref<6x32xf32, #tpu.memory_space<vmem>>, vector<1x32xf32>
    %cst_55 = arith.constant dense<0.000000e+00> : vector<8xf32>
    %119 = vector.multi_reduction <add>, %116, %cst_55 [1] : vector<8x32xf32> to vector<8xf32>
    %120 = vector.shape_cast %119 : vector<8xf32> to vector<8x1xf32>
    %cst_56 = arith.constant 3.200000e+01 : f32
    %121 = vector.broadcast %cst_56 : f32 to vector<8x1xf32>
    %122 = arith.divf %120, %121 : vector<8x1xf32>
    %123 = vector.broadcast %122 : vector<8x1xf32> to vector<8x32xf32>
    %124 = arith.subf %116, %123 : vector<8x32xf32>
    %125 = arith.mulf %124, %124 : vector<8x32xf32>
    %cst_57 = arith.constant dense<0.000000e+00> : vector<8xf32>
    %126 = vector.multi_reduction <add>, %125, %cst_57 [1] : vector<8x32xf32> to vector<8xf32>
    %127 = vector.shape_cast %126 : vector<8xf32> to vector<8x1xf32>
    %cst_58 = arith.constant 3.200000e+01 : f32
    %128 = vector.broadcast %cst_58 : f32 to vector<8x1xf32>
    %129 = arith.divf %127, %128 : vector<8x1xf32>
    %130 = vector.broadcast %122 : vector<8x1xf32> to vector<8x32xf32>
    %131 = arith.subf %116, %130 : vector<8x32xf32>
    %cst_59 = arith.constant 9.99999974E-6 : f32
    %132 = vector.broadcast %cst_59 : f32 to vector<8x1xf32>
    %133 = arith.addf %129, %132 : vector<8x1xf32>
    %134 = math.rsqrt %133 : vector<8x1xf32>
    %135 = vector.broadcast %134 : vector<8x1xf32> to vector<8x32xf32>
    %136 = arith.mulf %131, %135 : vector<8x32xf32>
    %137 = vector.broadcast %117 : vector<1x32xf32> to vector<8x32xf32>
    %138 = arith.mulf %136, %137 : vector<8x32xf32>
    %139 = vector.broadcast %118 : vector<1x32xf32> to vector<8x32xf32>
    %140 = arith.addf %138, %139 : vector<8x32xf32>
    %c0_60 = arith.constant 0 : index
    %c0_61 = arith.constant 0 : index
    %c0_62 = arith.constant 0 : index
    %141 = vector.load %arg9[%c0_60, %c0_61, %c0_62] : memref<1x8x32xf32, #tpu.memory_space<vmem>>, vector<1x8x32xf32>
    %142 = vector.shape_cast %141 : vector<1x8x32xf32> to vector<8x32xf32>
    %143 = vector.shape_cast %140 : vector<8x32xf32> to vector<1x8x32xf32>
    tpu.vector_store %arg9[%c0_60, %c0_61, %c0_62], %143 {strides = array<i32>} : memref<1x8x32xf32, #tpu.memory_space<vmem>>, vector<1x8x32xf32>,
    return
  }
  func.func @transform_0(%arg0: i32) -> (i32, i32, i32) {
    %c0_i32 = arith.constant 0 : i32
    %c0_i32_0 = arith.constant 0 : i32
    %c0_i32_1 = arith.constant 0 : i32
    return %arg0, %c0_i32, %c0_i32_0 : i32, i32, i32
  }
  func.func @transform_1(%arg0: i32) -> (i32, i32) {
    %c0_i32 = arith.constant 0 : i32
    %c0_i32_0 = arith.constant 0 : i32
    %c0_i32_1 = arith.constant 0 : i32
    return %c0_i32, %c0_i32_0 : i32, i32
  }
  func.func @transform_2(%arg0: i32) -> (i32, i32) {
    %c0_i32 = arith.constant 0 : i32
    %c0_i32_0 = arith.constant 0 : i32
    %c0_i32_1 = arith.constant 0 : i32
    return %c0_i32, %c0_i32_0 : i32, i32
  }
  func.func @transform_3(%arg0: i32) -> (i32, i32) {
    %c0_i32 = arith.constant 0 : i32
    %c0_i32_0 = arith.constant 0 : i32
    %c0_i32_1 = arith.constant 0 : i32
    return %c0_i32, %c0_i32_0 : i32, i32
  }
  func.func @transform_4(%arg0: i32) -> (i32, i32) {
    %c0_i32 = arith.constant 0 : i32
    %c0_i32_0 = arith.constant 0 : i32
    %c0_i32_1 = arith.constant 0 : i32
    return %c0_i32, %c0_i32_0 : i32, i32
  }
  func.func @transform_5(%arg0: i32) -> (i32, i32) {
    %c0_i32 = arith.constant 0 : i32
    %c0_i32_0 = arith.constant 0 : i32
    %c0_i32_1 = arith.constant 0 : i32
    return %c0_i32, %c0_i32_0 : i32, i32
  }
  func.func @transform_6(%arg0: i32) -> (i32, i32) {
    %c0_i32 = arith.constant 0 : i32
    %c0_i32_0 = arith.constant 0 : i32
    %c0_i32_1 = arith.constant 0 : i32
    return %c0_i32, %c0_i32_0 : i32, i32
  }
  func.func @transform_7(%arg0: i32) -> (i32, i32) {
    %c0_i32 = arith.constant 0 : i32
    %c0_i32_0 = arith.constant 0 : i32
    %c0_i32_1 = arith.constant 0 : i32
    return %c0_i32, %c0_i32_0 : i32, i32
  }
  func.func @transform_8(%arg0: i32) -> (i32, i32, i32) {
    %c0_i32 = arith.constant 0 : i32
    %c0_i32_0 = arith.constant 0 : i32
    %c0_i32_1 = arith.constant 0 : i32
    return %arg0, %c0_i32, %c0_i32_0 : i32, i32, i32
  }
}

</mosaic_0001>

<llo_original>
// kernel: tpu_custom_call.1
$region0: #{tpu_custom_call.1}
  #allocation0 [shape = 'u32[]', space=smem, size = 0x4, offset = 0x4, fixed_abs, tag = 'smem constant byte address 0x4 - core index']
  #allocation1 [shape = 'u32[144,128]{1,0:T(1,128)}', space=vmem, size = 0x12000, scoped, tag = 'internal scratch']
  #allocation2 [shape = 'f32[8,32]{1,0:T(8,128)}', space=vmem, size = 0x1000, scoped, tag = 'scratch operand']
  %s0 = inlined_call_operand.hbm [shape: f32[2,8,32], index: 0, kind: input, shape index: {}]
  %s1 = inlined_call_operand.vmem [shape: f32[32,96], index: 1, kind: input, shape index: {}]
  %s2 = inlined_call_operand.vmem [shape: f32[1,96], index: 2, kind: input, shape index: {}]
  %s3 = inlined_call_operand.vmem [shape: f32[32,32], index: 3, kind: input, shape index: {}]
  %s4 = inlined_call_operand.vmem [shape: f32[32,64], index: 4, kind: input, shape index: {}]
  %s5 = inlined_call_operand.vmem [shape: f32[1,64], index: 5, kind: input, shape index: {}]
  %s6 = inlined_call_operand.vmem [shape: f32[64,32], index: 6, kind: input, shape index: {}]
  %s7 = inlined_call_operand.vmem [shape: f32[6,32], index: 7, kind: input, shape index: {}]
  %s8 = inlined_call_operand.hbm [shape: f32[2,8,32], index: 8, kind: output, shape index: {}]
  %s9 = sld [smem:[#allocation0]]
  $region69: #{tpu_custom_call.1} parent=0
    _
  %s11 = ssub.s32 1, %s9
  %s12 = scalar_select 0, %s11, %s9
  $region1: #{tpu_custom_call.1} parent=0
    #allocation3 [shape = 'u8[8192]{0}', space=vmem, size = 0x2000, scoped, tag = 'input window, operand 0']
    #allocation4 [shape = 's32[2]{0}', space=sflag, size = 0x8, scoped, tag = 'scoped memory for tpu_custom_call.1']
    #allocation5 [shape = 's32[2]{0}', space=sflag, size = 0x8, scoped, tag = 'scoped memory for tpu_custom_call.1']
    #allocation6 [shape = 'u8[8192]{0}', space=vmem, size = 0x2000, scoped, tag = 'output window, operand 0']
    %13 = vsyncpa [#allocation4], 0
    %s14 = scalar_lea.sflag [#allocation4], 1
    %15 = vsyncpa %s14, 0
    %16 = vsyncpa [#allocation5], 0
    %s17 = scalar_lea.sflag [#allocation5], 1
    %18 = vsyncpa %s17, 0
    loop: start=0, step=1, limit=4
    $region2: #{tpu_custom_call.1} parent=1 // loop_pre_header
      _
    $region3: #{tpu_custom_call.1} parent=1 // loop_header
      %s20 = sphi 0, %s24
      %p21 = scmp.ge.s32.totalorder %s20, 4
      %s30 = sphi 0, %s32
      %s33 = sphi 0, %s30
      %s34 = sphi 0, %s33
      %s50 = sphi 0, %s34
      %s54 = sphi 0, %s54
      %s56 = sphi 0, %s54
      %s57 = sphi 0, %s56
      %s71 = sphi 0, %s57
      %s75 = sphi 0, %s75
      %s77 = sphi 0, %s75
      %s78 = sphi 0, %s77
      %s92 = sphi 0, %s78
      %s96 = sphi 0, %s96
      %s98 = sphi 0, %s96
      %s99 = sphi 0, %s98
      %s113 = sphi 0, %s99
      %s117 = sphi 0, %s117
      %s119 = sphi 0, %s117
      %s120 = sphi 0, %s119
      %s134 = sphi 0, %s120
      %s138 = sphi 0, %s138
      %s140 = sphi 0, %s138
      %s141 = sphi 0, %s140
      %s155 = sphi 0, %s141
      %s159 = sphi 0, %s159
      %s161 = sphi 0, %s159
      %s162 = sphi 0, %s161
      %s176 = sphi 0, %s162
      %s180 = sphi 0, %s180
      %s182 = sphi 0, %s180
      %s183 = sphi 0, %s182
      %s197 = sphi 0, %s183
      %s203 = sphi 0, %s205
      %s206 = sphi 0, %s203
      %s207 = sphi 0, %s206
      %s223 = sphi 0, %s207
    $region4: #{tpu_custom_call.1} parent=1 // loop_header_branch
      %23 = sbr.rel (%p21) target = $region8
    $region5: #{tpu_custom_call.1} parent=1 // loop_body
      %s25 = ssub.s32 %s20, 1
      %s26 = ssub.s32 %s20, 2
      %s27 = sadd.s32 %s20, 1
      %s28 = ssub.s32 %s20, %s27
      %p29 = scmp.eq.s32.totalorder %s28, 0
      %s31 = sadd.s32 %s30, 1
      %s32 = scalar_select %p29, %s30, %s31
      %p35 = pneg %p29
      %p36 = scmp.eq.s32.totalorder %s20, 1
      %p37 = por %p35, %p36
      %p38 = scmp.ne.s32.totalorder %s30, %s33
      %p39 = scmp.eq.s32.totalorder %s20, 0
      %p40 = por %p38, %p39
      %p41 = scmp.ne.s32.totalorder %s30, %s33
      %p42 = scmp.eq.s32.totalorder %s25, 1
      %p43 = por %p41, %p42
      %p44 = scmp.ne.s32.totalorder %s33, %s34
      %p45 = scmp.eq.s32.totalorder %s25, 0
      %p46 = por %p44, %p45
      %p47 = scmp.ne.s32.totalorder %s33, %s34
      %p48 = scmp.eq.s32.totalorder %s26, 1
      %p49 = por %p47, %p48
      %p51 = scmp.ne.s32.totalorder %s34, %s50
      %p52 = scmp.eq.s32.totalorder %s26, 0
      %p53 = por %p51, %p52
      %s55 = sadd.s32 %s54, 1
      %p58 = scmp.eq.s32.totalorder %s20, 1
      %p59 = scmp.ne.s32.totalorder %s54, %s56
      %p60 = scmp.eq.s32.totalorder %s20, 0
      %p61 = por %p59, %p60
      %p62 = scmp.ne.s32.totalorder %s54, %s56
      %p63 = scmp.eq.s32.totalorder %s25, 1
      %p64 = por %p62, %p63
      %p65 = scmp.ne.s32.totalorder %s56, %s57
      %p66 = scmp.eq.s32.totalorder %s25, 0
      %p67 = por %p65, %p66
      %p68 = scmp.ne.s32.totalorder %s56, %s57
      %p69 = scmp.eq.s32.totalorder %s26, 1
      %p70 = por %p68, %p69
      %p72 = scmp.ne.s32.totalorder %s57, %s71
      %p73 = scmp.eq.s32.totalorder %s26, 0
      %p74 = por %p72, %p73
      %s76 = sadd.s32 %s75, 1
      %p79 = scmp.eq.s32.totalorder %s20, 1
      %p80 = scmp.ne.s32.totalorder %s75, %s77
      %p81 = scmp.eq.s32.totalorder %s20, 0
      %p82 = por %p80, %p81
      %p83 = scmp.ne.s32.totalorder %s75, %s77
      %p84 = scmp.eq.s32.totalorder %s25, 1
      %p85 = por %p83, %p84
      %p86 = scmp.ne.s32.totalorder %s77, %s78
      %p87 = scmp.eq.s32.totalorder %s25, 0
      %p88 = por %p86, %p87
      %p89 = scmp.ne.s32.totalorder %s77, %s78
      %p90 = scmp.eq.s32.totalorder %s26, 1
      %p91 = por %p89, %p90
      %p93 = scmp.ne.s32.totalorder %s78, %s92
      %p94 = scmp.eq.s32.totalorder %s26, 0
      %p95 = por %p93, %p94
      %s97 = sadd.s32 %s96, 1
      %p100 = scmp.eq.s32.totalorder %s20, 1
      %p101 = scmp.ne.s32.totalorder %s96, %s98
      %p102 = scmp.eq.s32.totalorder %s20, 0
      %p103 = por %p101, %p102
      %p104 = scmp.ne.s32.totalorder %s96, %s98
      %p105 = scmp.eq.s32.totalorder %s25, 1
      %p106 = por %p104, %p105
      %p107 = scmp.ne.s32.totalorder %s98, %s99
      %p108 = scmp.eq.s32.totalorder %s25, 0
      %p109 = por %p107, %p108
      %p110 = scmp.ne.s32.totalorder %s98, %s99
      %p111 = scmp.eq.s32.totalorder %s26, 1
      %p112 = por %p110, %p111
      %p114 = scmp.ne.s32.totalorder %s99, %s113
      %p115 = scmp.eq.s32.totalorder %s26, 0
      %p116 = por %p114, %p115
      %s118 = sadd.s32 %s117, 1
      %p121 = scmp.eq.s32.totalorder %s20, 1
      %p122 = scmp.ne.s32.totalorder %s117, %s119
      %p123 = scmp.eq.s32.totalorder %s20, 0
      %p124 = por %p122, %p123
      %p125 = scmp.ne.s32.totalorder %s117, %s119
      %p126 = scmp.eq.s32.totalorder %s25, 1
      %p127 = por %p125, %p126
      %p128 = scmp.ne.s32.totalorder %s119, %s120
      %p129 = scmp.eq.s32.totalorder %s25, 0
      %p130 = por %p128, %p129
      %p131 = scmp.ne.s32.totalorder %s119, %s120
      %p132 = scmp.eq.s32.totalorder %s26, 1
      %p133 = por %p131, %p132
      %p135 = scmp.ne.s32.totalorder %s120, %s134
      %p136 = scmp.eq.s32.totalorder %s26, 0
      %p137 = por %p135, %p136
      %s139 = sadd.s32 %s138, 1
      %p142 = scmp.eq.s32.totalorder %s20, 1
      %p143 = scmp.ne.s32.totalorder %s138, %s140
      %p144 = scmp.eq.s32.totalorder %s20, 0
      %p145 = por %p143, %p144
      %p146 = scmp.ne.s32.totalorder %s138, %s140
      %p147 = scmp.eq.s32.totalorder %s25, 1
      %p148 = por %p146, %p147
      %p149 = scmp.ne.s32.totalorder %s140, %s141
      %p150 = scmp.eq.s32.totalorder %s25, 0
      %p151 = por %p149, %p150
      %p152 = scmp.ne.s32.totalorder %s140, %s141
      %p153 = scmp.eq.s32.totalorder %s26, 1
      %p154 = por %p152, %p153
      %p156 = scmp.ne.s32.totalorder %s141, %s155
      %p157 = scmp.eq.s32.totalorder %s26, 0
      %p158 = por %p156, %p157
      %s160 = sadd.s32 %s159, 1
      %p163 = scmp.eq.s32.totalorder %s20, 1
      %p164 = scmp.ne.s32.totalorder %s159, %s161
      %p165 = scmp.eq.s32.totalorder %s20, 0
      %p166 = por %p164, %p165
      %p167 = scmp.ne.s32.totalorder %s159, %s161
      %p168 = scmp.eq.s32.totalorder %s25, 1
      %p169 = por %p167, %p168
      %p170 = scmp.ne.s32.totalorder %s161, %s162
      %p171 = scmp.eq.s32.totalorder %s25, 0
      %p172 = por %p170, %p171
      %p173 = scmp.ne.s32.totalorder %s161, %s162
      %p174 = scmp.eq.s32.totalorder %s26, 1
      %p175 = por %p173, %p174
      %p177 = scmp.ne.s32.totalorder %s162, %s176
      %p178 = scmp.eq.s32.totalorder %s26, 0
      %p179 = por %p177, %p178
      %s181 = sadd.s32 %s180, 1
      %p184 = scmp.eq.s32.totalorder %s20, 1
      %p185 = scmp.ne.s32.totalorder %s180, %s182
      %p186 = scmp.eq.s32.totalorder %s20, 0
      %p187 = por %p185, %p186
      %p188 = scmp.ne.s32.totalorder %s180, %s182
      %p189 = scmp.eq.s32.totalorder %s25, 1
      %p190 = por %p188, %p189
      %p191 = scmp.ne.s32.totalorder %s182, %s183
      %p192 = scmp.eq.s32.totalorder %s25, 0
      %p193 = por %p191, %p192
      %p194 = scmp.ne.s32.totalorder %s182, %s183
      %p195 = scmp.eq.s32.totalorder %s26, 1
      %p196 = por %p194, %p195
      %p198 = scmp.ne.s32.totalorder %s183, %s197
      %p199 = scmp.eq.s32.totalorder %s26, 0
      %p200 = por %p198, %p199
      %s201 = ssub.s32 %s20, %s27
      %p202 = scmp.eq.s32.totalorder %s201, 0
      %s204 = sadd.s32 %s203, 1
      %s205 = scalar_select %p202, %s203, %s204
      %p208 = pneg %p202
      %p209 = scmp.eq.s32.totalorder %s20, 1
      %p210 = por %p208, %p209
      %p211 = scmp.ne.s32.totalorder %s203, %s206
      %p212 = scmp.eq.s32.totalorder %s20, 0
      %p213 = por %p211, %p212
      %p214 = scmp.ne.s32.totalorder %s203, %s206
      %p215 = scmp.eq.s32.totalorder %s25, 1
      %p216 = por %p214, %p215
      %p217 = scmp.ne.s32.totalorder %s206, %s207
      %p218 = scmp.eq.s32.totalorder %s25, 0
      %p219 = por %p217, %p218
      %p220 = scmp.ne.s32.totalorder %s206, %s207
      %p221 = scmp.eq.s32.totalorder %s26, 1
      %p222 = por %p220, %p221
      %p224 = scmp.ne.s32.totalorder %s207, %s223
      %p225 = scmp.eq.s32.totalorder %s26, 0
      %p226 = por %p224, %p225
      %p227 = scmp.le.s32.totalorder 1, %s20
      %p228 = scmp.lt.s32.totalorder %s20, 3
      %p229 = pnand %p227, %p228
      %p230 = pneg %p229
      // Predicated region
      $region9: #{tpu_custom_call.1} parent=5 // pred_check
        _
      $region10: #{tpu_custom_call.1} parent=5 // pred_check_branch
        %232 = sbr.rel (%p229) target = $region12
      $region11: #{tpu_custom_call.1} parent=5 // pred_region
        %s233 = ssub.s32 %s20, 1
        // Predicated region
        $region13: #{tpu_custom_call.1} parent=11 // pred_check
          %p234 = pneg %p67
        $region14: #{tpu_custom_call.1} parent=11 // pred_check_branch
          %236 = sbr.rel (%p234) target = $region16
        $region15: #{tpu_custom_call.1} parent=11 // pred_region
          _
        $region16: #{tpu_custom_call.1} parent=11 // pred_fallthru
          _
        // Predicated region
        $region17: #{tpu_custom_call.1} parent=11 // pred_check
          %p237 = pneg %p88
        $region18: #{tpu_custom_call.1} parent=11 // pred_check_branch
          %239 = sbr.rel (%p237) target = $region20
        $region19: #{tpu_custom_call.1} parent=11 // pred_region
          _
        $region20: #{tpu_custom_call.1} parent=11 // pred_fallthru
          _
        // Predicated region
        $region21: #{tpu_custom_call.1} parent=11 // pred_check
          %p240 = pneg %p109
        $region22: #{tpu_custom_call.1} parent=11 // pred_check_branch
          %242 = sbr.rel (%p240) target = $region24
        $region23: #{tpu_custom_call.1} parent=11 // pred_region
          _
        $region24: #{tpu_custom_call.1} parent=11 // pred_fallthru
          _
        // Predicated region
        $region25: #{tpu_custom_call.1} parent=11 // pred_check
          %p243 = pneg %p130
        $region26: #{tpu_custom_call.1} parent=11 // pred_check_branch
          %245 = sbr.rel (%p243) target = $region28
        $region27: #{tpu_custom_call.1} parent=11 // pred_region
          _
        $region28: #{tpu_custom_call.1} parent=11 // pred_fallthru
          _
        // Predicated region
        $region29: #{tpu_custom_call.1} parent=11 // pred_check
          %p246 = pneg %p151
        $region30: #{tpu_custom_call.1} parent=11 // pred_check_branch
          %248 = sbr.rel (%p246) target = $region32
        $region31: #{tpu_custom_call.1} parent=11 // pred_region
          _
        $region32: #{tpu_custom_call.1} parent=11 // pred_fallthru
          _
        // Predicated region
        $region33: #{tpu_custom_call.1} parent=11 // pred_check
          %p249 = pneg %p172
        $region34: #{tpu_custom_call.1} parent=11 // pred_check_branch
          %251 = sbr.rel (%p249) target = $region36
        $region35: #{tpu_custom_call.1} parent=11 // pred_region
          _
        $region36: #{tpu_custom_call.1} parent=11 // pred_fallthru
          _
        // Predicated region
        $region37: #{tpu_custom_call.1} parent=11 // pred_check
          %p252 = pneg %p193
        $region38: #{tpu_custom_call.1} parent=11 // pred_check_branch
          %254 = sbr.rel (%p252) target = $region40
        $region39: #{tpu_custom_call.1} parent=11 // pred_region
          _
        $region40: #{tpu_custom_call.1} parent=11 // pred_fallthru
          _
      $region12: #{tpu_custom_call.1} parent=5 // pred_fallthru
        _
      %p255 = scmp.lt.s32.totalorder %s20, 2
      // Predicated region
      $region41: #{tpu_custom_call.1} parent=5 // pred_check
        %p256 = pneg %p255
      $region42: #{tpu_custom_call.1} parent=5 // pred_check_branch
        %258 = sbr.rel (%p256) target = $region44
      $region43: #{tpu_custom_call.1} parent=5 // pred_region
        // Predicated region
        $region45: #{tpu_custom_call.1} parent=43 // pred_check
          %p259 = pneg %p40
        $region46: #{tpu_custom_call.1} parent=43 // pred_check_branch
          %261 = sbr.rel (%p259) target = $region48
        $region47: #{tpu_custom_call.1} parent=43 // pred_region
          %s262 = sand.u32 %s30, 1
          %s263 = scalar_lea.sflag [#allocation4], %s262
          %s264 = sand.u32 %s30, 1
          %s265 = smul.addr %s264, 8
          %s266 = scalar_lea.vmem [#allocation3], %s265
          %s268 = ssub.s32 128, 128
          %269 = vsyncadd %s263, %s268
          %s270 = smul.addr %s20, 128
          %s271 = scalar_lea.hbm %s0, %s270
          %s273 = sshll.u32 %s266, 4
          %s274 = int_to_ptr.vmem [resolvable:$true] %s273
          %276 = dma.hbm_to_vmem [thread:$0]  %s271, 128, %s274, %s263
        $region48: #{tpu_custom_call.1} parent=43 // pred_fallthru
          _
      $region44: #{tpu_custom_call.1} parent=5 // pred_fallthru
        _
      %p277 = scmp.le.s32.totalorder 1, %s20
      %p278 = scmp.lt.s32.totalorder %s20, 3
      %p279 = pnand %p277, %p278
      %p280 = pneg %p279
      // Predicated region
      $region49: #{tpu_custom_call.1} parent=5 // pred_check
        _
      $region50: #{tpu_custom_call.1} parent=5 // pred_check_branch
        %282 = sbr.rel (%p279) target = $region52
      $region51: #{tpu_custom_call.1} parent=5 // pred_region
        %s283 = ssub.s32 %s20, 1
        %s284 = sand.u32 %s33, 1
        %s285 = scalar_lea.sflag [#allocation4], %s284
        %s286 = sand.u32 %s33, 1
        %s287 = smul.addr %s286, 8
        %s288 = scalar_lea.vmem [#allocation3], %s287
        // Predicated region
        $region53: #{tpu_custom_call.1} parent=51 // pred_check
          %p289 = pneg %p46
        $region54: #{tpu_custom_call.1} parent=51 // pred_check_branch
          %291 = sbr.rel (%p289) target = $region56
        $region55: #{tpu_custom_call.1} parent=51 // pred_region
          %292 = dma.done %s285, 128
        $region56: #{tpu_custom_call.1} parent=51 // pred_fallthru
          _
        %s293 = sand.u32 %s33, 1
        %s294 = scalar_lea.sflag [#allocation4], %s293
        %s295 = sand.u32 %s33, 1
        %s296 = smul.addr %s295, 8
        %s297 = scalar_lea.vmem [#allocation3], %s296
        %p298 = pneg %p46
        %p299 = pneg %p43
        %p300 = pneg %p67
        %p301 = pneg %p64
        %p302 = pneg %p88
        %p303 = pneg %p85
        %p304 = pneg %p109
        %p305 = pneg %p106
        %p306 = pneg %p130
        %p307 = pneg %p127
        %p308 = pneg %p151
        %p309 = pneg %p148
        %p310 = pneg %p172
        %p311 = pneg %p169
        %p312 = pneg %p193
        %p313 = pneg %p190
        %p314 = pneg %p219
        %p315 = pneg %p216
        %s316 = sand.u32 %s206, 1
        %s317 = scalar_lea.sflag [#allocation5], %s316
        %s318 = sand.u32 %s206, 1
        %s319 = smul.addr %s318, 8
        %s320 = scalar_lea.vmem [#allocation6], %s319
        %v321 = vld [vmem:[%s288] sm:$0xff]
        %v322 = vld [vmem:[%s1] sm:$0xff]
        %v323 = vld [vmem:[%s1 + $0x8] sm:$0xff]
        %v324 = vld [vmem:[%s1 + $0x10] sm:$0xff]
        %v325 = vld [vmem:[%s1 + $0x18] sm:$0xff]
        %v326 = vld [vmem:[%s2] sm:$0x1]
        %v328 = vlaneseq
        %v329 = vshrl.u32 %v328, 7
        %v330 = vsub.s32 0, %v329
        %v331 = vrot.slane %v326, %v330
        %vm333 = vcmask 261120
        %v335 = vsel %vm333, %v321, 0
        %337 = vmatprep.subr.mxu0 0.0
        %338 = vmatpush1.msra.mxu0 %v322
        %339 = vmatprep.subr.mxu0 0.0
        %340 = vmatpush1.msra.mxu0 %v323
        %341 = vmatprep.subr.mxu0 0.0
        %342 = vmatpush1.msra.mxu0 %v324
        %343 = vmatprep.subr.mxu0 0.0
        %344 = vmatpush1.msra.mxu0 %v325
        %345 = vmatprep.subr.mxu0 0.0
        %346 = vmatpush1.msra.mxu0 0.0
        %347 = vmatprep.subr.mxu0 0.0
        %348 = vmatpush1.msra.mxu0 0.0
        %349 = vmatprep.subr.mxu0 0.0
        %350 = vmatpush1.msra.mxu0 0.0
        %351 = vmatprep.subr.mxu0 0.0
        %352 = vmatpush1.msra.mxu0 0.0
        %353 = vmatprep.subr.mxu0 0.0
        %354 = vmatpush1.msra.mxu0 0.0
        %355 = vmatprep.subr.mxu0 0.0
        %356 = vmatpush1.msra.mxu0 0.0
        %357 = vmatprep.subr.mxu0 0.0
        %358 = vmatpush1.msra.mxu0 0.0
        %359 = vmatprep.subr.mxu0 0.0
        %360 = vmatpush1.msra.mxu0 0.0
        %361 = vmatprep.subr.mxu0 0.0
        %362 = vmatpush1.msra.mxu0 0.0
        %363 = vmatprep.subr.mxu0 0.0
        %364 = vmatpush1.msra.mxu0 0.0
        %365 = vmatprep.subr.mxu0 0.0
        %366 = vmatpush1.msra.mxu0 0.0
        %367 = vmatprep.subr.mxu0 0.0
        %368 = vmatpush1.msra.mxu0 0.0
        %369 = vmatprep.subr.mxu0 0.0
        %370 = vmatpush1.msra.mxu0 0.0
        %371 = vmatprep.subr.mxu0 0.0
        %372 = vmatpush1.msra.mxu0 0.0
        %373 = vmatprep.subr.mxu0 0.0
        %374 = vmatpush1.msra.mxu0 0.0
        %375 = vmatprep.subr.mxu0 0.0
        %376 = vmatpush1.msra.mxu0 0.0
        %377 = vmatprep.subr.mxu0 0.0
        %378 = vmatpush1.msra.mxu0 0.0
        %379 = vmatprep.subr.mxu0 0.0
        %380 = vmatpush1.msra.mxu0 0.0
        %381 = vmatprep.subr.mxu0 0.0
        %382 = vmatpush1.msra.mxu0 0.0
        %383 = vmatprep.subr.mxu0 0.0
        %384 = vmatpush1.msra.mxu0 0.0
        %385 = vmatprep.subr.mxu0 0.0
        %386 = vmatpush1.msra.mxu0 0.0
        %387 = vmatprep.subr.mxu0 0.0
        %388 = vmatpush1.msra.mxu0 0.0
        %389 = vmatprep.subr.mxu0 0.0
        %390 = vmatpush1.msra.mxu0 0.0
        %391 = vmatprep.subr.mxu0 0.0
        %392 = vmatpush1.msra.mxu0 0.0
        %393 = vmatprep.subr.mxu0 0.0
        %394 = vmatpush1.msra.mxu0 0.0
        %395 = vmatprep.subr.mxu0 0.0
        %396 = vmatpush1.msra.mxu0 0.0
        %397 = vmatprep.subr.mxu0 0.0
        %398 = vmatpush1.msra.mxu0 0.0
        %399 = vmatprep.subr.mxu0 0.0
        %400 = vmatpush1.msra.mxu0 0.0
        %401 = vmatprep.mubr.f32.mxu0 0.0
        %402 = vmatmul.mubr.f32.gmra.mrb[0].mxu0 %v335
        %v403 = vpop.f32.mrb[0].mxu0
        %v404 = vadd.f32 %v331, %v403
        %v405 = vpop.f32.mrb[0].mxu0
        %406 = vdwg.mxu0
        %408 = vrot.lane.b32.xlu0 %v404, 96
        %v409 = vpop.permute.xlu0 %408
        %vm410 = vcmask 64512
        %v411 = vsel %vm410, %v404, 0
        %v413 = vsel %vm410, %v409, 0
        %415 = vmatprep.subr.mxu0 0.0
        %416 = vmatpush1.xpose.msra.mxu0 %v413
        %417 = vmatprep.subr.mxu0 0.0
        %418 = vmatpush1.xpose.msra.mxu0 0.0
        %419 = vmatprep.subr.mxu0 0.0
        %420 = vmatpush1.xpose.msra.mxu0 0.0
        %421 = vmatprep.subr.mxu0 0.0
        %422 = vmatpush1.xpose.msra.mxu0 0.0
        %423 = vmatprep.subr.mxu0 0.0
        %424 = vmatpush1.xpose.msra.mxu0 0.0
        %425 = vmatprep.subr.mxu0 0.0
        %426 = vmatpush1.xpose.msra.mxu0 0.0
        %427 = vmatprep.subr.mxu0 0.0
        %428 = vmatpush1.xpose.msra.mxu0 0.0
        %429 = vmatprep.subr.mxu0 0.0
        %430 = vmatpush1.xpose.msra.mxu0 0.0
        %431 = vmatprep.subr.mxu0 0.0
        %432 = vmatpush1.xpose.msra.mxu0 0.0
        %433 = vmatprep.subr.mxu0 0.0
        %434 = vmatpush1.xpose.msra.mxu0 0.0
        %435 = vmatprep.subr.mxu0 0.0
        %436 = vmatpush1.xpose.msra.mxu0 0.0
        %437 = vmatprep.subr.mxu0 0.0
        %438 = vmatpush1.xpose.msra.mxu0 0.0
        %439 = vmatprep.subr.mxu0 0.0
        %440 = vmatpush1.xpose.msra.mxu0 0.0
        %441 = vmatprep.subr.mxu0 0.0
        %442 = vmatpush1.xpose.msra.mxu0 0.0
        %443 = vmatprep.subr.mxu0 0.0
        %444 = vmatpush1.xpose.msra.mxu0 0.0
        %445 = vmatprep.subr.mxu0 0.0
        %446 = vmatpush1.xpose.msra.mxu0 0.0
        %447 = vmatprep.subr.mxu0 0.0
        %448 = vmatpush1.xpose.msra.mxu0 0.0
        %449 = vmatprep.subr.mxu0 0.0
        %450 = vmatpush1.xpose.msra.mxu0 0.0
        %451 = vmatprep.subr.mxu0 0.0
        %452 = vmatpush1.xpose.msra.mxu0 0.0
        %453 = vmatprep.subr.mxu0 0.0
        %454 = vmatpush1.xpose.msra.mxu0 0.0
        %455 = vmatprep.subr.mxu0 0.0
        %456 = vmatpush1.xpose.msra.mxu0 0.0
        %457 = vmatprep.subr.mxu0 0.0
        %458 = vmatpush1.xpose.msra.mxu0 0.0
        %459 = vmatprep.subr.mxu0 0.0
        %460 = vmatpush1.xpose.msra.mxu0 0.0
        %461 = vmatprep.subr.mxu0 0.0
        %462 = vmatpush1.xpose.msra.mxu0 0.0
        %463 = vmatprep.subr.mxu0 0.0
        %464 = vmatpush1.xpose.msra.mxu0 0.0
        %465 = vmatprep.subr.mxu0 0.0
        %466 = vmatpush1.xpose.msra.mxu0 0.0
        %467 = vmatprep.subr.mxu0 0.0
        %468 = vmatpush1.xpose.msra.mxu0 0.0
        %469 = vmatprep.subr.mxu0 0.0
        %470 = vmatpush1.xpose.msra.mxu0 0.0
        %471 = vmatprep.subr.mxu0 0.0
        %472 = vmatpush1.xpose.msra.mxu0 0.0
        %473 = vmatprep.subr.mxu0 0.0
        %474 = vmatpush1.xpose.msra.mxu0 0.0
        %475 = vmatprep.subr.mxu0 0.0
        %476 = vmatpush1.xpose.msra.mxu0 0.0
        %477 = vmatprep.subr.mxu0 0.0
        %478 = vmatpush1.xpose.msra.mxu0 0.0
        %479 = vmatprep.mubr.f32.mxu0 0.0
        %480 = vmatmul.mubr.f32.gmra.mrb[0].mxu0 %v411
        %v481 = vpop.f32.mrb[0].mxu0
        %v482 = vadd.f32 0.0, %v481
        %v483 = vpop.f32.mrb[0].mxu0
        %484 = vdwg.mxu0
        %v485 = vsel %vm410, %v482, -inf
        %486 = vmax.xlane.f32.xlu0 %v485
        %v487 = vpop.xlane.xlu0 %486
        %v488 = vsub.f32 %v482, %v487
        %v489 = vmul.f32 %v488, 1.442695
        %v490 = vpow.pop %v489
        %v491 = vsel %vm410, %v490, 0.0
        %492 = vadd.xlane.f32.xlu0 %v491
        %v493 = vpop.xlane.xlu0 %492
        %494 = vrot.lane.b32.xlu0 %v404, 64
        %v495 = vpop.permute.xlu0 %494
        %v498 = vsel %vm410, %v490, 0
        %500 = vmatprep.subr.mxu0 0.0
        %501 = vmatpush1.msra.mxu0 %v495
        %502 = vmatprep.subr.mxu0 0.0
        %503 = vmatpush1.msra.mxu0 0.0
        %504 = vmatprep.subr.mxu0 0.0
        %505 = vmatpush1.msra.mxu0 0.0
        %506 = vmatprep.subr.mxu0 0.0
        %507 = vmatpush1.msra.mxu0 0.0
        %508 = vmatprep.subr.mxu0 0.0
        %509 = vmatpush1.msra.mxu0 0.0
        %510 = vmatprep.subr.mxu0 0.0
        %511 = vmatpush1.msra.mxu0 0.0
        %512 = vmatprep.subr.mxu0 0.0
        %513 = vmatpush1.msra.mxu0 0.0
        %514 = vmatprep.subr.mxu0 0.0
        %515 = vmatpush1.msra.mxu0 0.0
        %516 = vmatprep.subr.mxu0 0.0
        %517 = vmatpush1.msra.mxu0 0.0
        %518 = vmatprep.subr.mxu0 0.0
        %519 = vmatpush1.msra.mxu0 0.0
        %520 = vmatprep.subr.mxu0 0.0
        %521 = vmatpush1.msra.mxu0 0.0
        %522 = vmatprep.subr.mxu0 0.0
        %523 = vmatpush1.msra.mxu0 0.0
        %524 = vmatprep.subr.mxu0 0.0
        %525 = vmatpush1.msra.mxu0 0.0
        %526 = vmatprep.subr.mxu0 0.0
        %527 = vmatpush1.msra.mxu0 0.0
        %528 = vmatprep.subr.mxu0 0.0
        %529 = vmatpush1.msra.mxu0 0.0
        %530 = vmatprep.subr.mxu0 0.0
        %531 = vmatpush1.msra.mxu0 0.0
        %532 = vmatprep.subr.mxu0 0.0
        %533 = vmatpush1.msra.mxu0 0.0
        %534 = vmatprep.subr.mxu0 0.0
        %535 = vmatpush1.msra.mxu0 0.0
        %536 = vmatprep.subr.mxu0 0.0
        %537 = vmatpush1.msra.mxu0 0.0
        %538 = vmatprep.subr.mxu0 0.0
        %539 = vmatpush1.msra.mxu0 0.0
        %540 = vmatprep.subr.mxu0 0.0
        %541 = vmatpush1.msra.mxu0 0.0
        %542 = vmatprep.subr.mxu0 0.0
        %543 = vmatpush1.msra.mxu0 0.0
        %544 = vmatprep.subr.mxu0 0.0
        %545 = vmatpush1.msra.mxu0 0.0
        %546 = vmatprep.subr.mxu0 0.0
        %547 = vmatpush1.msra.mxu0 0.0
        %548 = vmatprep.subr.mxu0 0.0
        %549 = vmatpush1.msra.mxu0 0.0
        %550 = vmatprep.subr.mxu0 0.0
        %551 = vmatpush1.msra.mxu0 0.0
        %552 = vmatprep.subr.mxu0 0.0
        %553 = vmatpush1.msra.mxu0 0.0
        %554 = vmatprep.subr.mxu0 0.0
        %555 = vmatpush1.msra.mxu0 0.0
        %556 = vmatprep.subr.mxu0 0.0
        %557 = vmatpush1.msra.mxu0 0.0
        %558 = vmatprep.subr.mxu0 0.0
        %559 = vmatpush1.msra.mxu0 0.0
        %560 = vmatprep.subr.mxu0 0.0
        %561 = vmatpush1.msra.mxu0 0.0
        %562 = vmatprep.subr.mxu0 0.0
        %563 = vmatpush1.msra.mxu0 0.0
        %564 = vmatprep.mubr.f32.mxu0 0.0
        %565 = vmatmul.mubr.f32.gmra.mrb[0].mxu0 %v498
        %v566 = vpop.f32.mrb[0].mxu0
        %v567 = vadd.f32 0.0, %v566
        %v568 = vpop.f32.mrb[0].mxu0
        %569 = vdwg.mxu0
        %v570 = vrcp.pop %v493
        %v571 = vmul.f32 %v567, %v570
        %572 = vst.msk [vmem:[#allocation2] sm:$0xff] %vm410, %v571
        %573 = vrot.lane.b32.xlu0 %v404, 120
        %v574 = vpop.permute.xlu0 %573
        %575 = vrot.lane.b32.xlu0 %v404, 88
        %v576 = vpop.permute.xlu0 %575
        %v577 = vsel %vm410, %v574, 0
        %v579 = vsel %vm410, %v576, 0
        %581 = vmatprep.subr.mxu0 0.0
        %582 = vmatpush1.xpose.msra.mxu0 %v579
        %583 = vmatprep.subr.mxu0 0.0
        %584 = vmatpush1.xpose.msra.mxu0 0.0
        %585 = vmatprep.subr.mxu0 0.0
        %586 = vmatpush1.xpose.msra.mxu0 0.0
        %587 = vmatprep.subr.mxu0 0.0
        %588 = vmatpush1.xpose.msra.mxu0 0.0
        %589 = vmatprep.subr.mxu0 0.0
        %590 = vmatpush1.xpose.msra.mxu0 0.0
        %591 = vmatprep.subr.mxu0 0.0
        %592 = vmatpush1.xpose.msra.mxu0 0.0
        %593 = vmatprep.subr.mxu0 0.0
        %594 = vmatpush1.xpose.msra.mxu0 0.0
        %595 = vmatprep.subr.mxu0 0.0
        %596 = vmatpush1.xpose.msra.mxu0 0.0
        %597 = vmatprep.subr.mxu0 0.0
        %598 = vmatpush1.xpose.msra.mxu0 0.0
        %599 = vmatprep.subr.mxu0 0.0
        %600 = vmatpush1.xpose.msra.mxu0 0.0
        %601 = vmatprep.subr.mxu0 0.0
        %602 = vmatpush1.xpose.msra.mxu0 0.0
        %603 = vmatprep.subr.mxu0 0.0
        %604 = vmatpush1.xpose.msra.mxu0 0.0
        %605 = vmatprep.subr.mxu0 0.0
        %606 = vmatpush1.xpose.msra.mxu0 0.0
        %607 = vmatprep.subr.mxu0 0.0
        %608 = vmatpush1.xpose.msra.mxu0 0.0
        %609 = vmatprep.subr.mxu0 0.0
        %610 = vmatpush1.xpose.msra.mxu0 0.0
        %611 = vmatprep.subr.mxu0 0.0
        %612 = vmatpush1.xpose.msra.mxu0 0.0
        %613 = vmatprep.subr.mxu0 0.0
        %614 = vmatpush1.xpose.msra.mxu0 0.0
        %615 = vmatprep.subr.mxu0 0.0
        %616 = vmatpush1.xpose.msra.mxu0 0.0
        %617 = vmatprep.subr.mxu0 0.0
        %618 = vmatpush1.xpose.msra.mxu0 0.0
        %619 = vmatprep.subr.mxu0 0.0
        %620 = vmatpush1.xpose.msra.mxu0 0.0
        %621 = vmatprep.subr.mxu0 0.0
        %622 = vmatpush1.xpose.msra.mxu0 0.0
        %623 = vmatprep.subr.mxu0 0.0
        %624 = vmatpush1.xpose.msra.mxu0 0.0
        %625 = vmatprep.subr.mxu0 0.0
        %626 = vmatpush1.xpose.msra.mxu0 0.0
        %627 = vmatprep.subr.mxu0 0.0
        %628 = vmatpush1.xpose.msra.mxu0 0.0
        %629 = vmatprep.subr.mxu0 0.0
        %630 = vmatpush1.xpose.msra.mxu0 0.0
        %631 = vmatprep.subr.mxu0 0.0
        %632 = vmatpush1.xpose.msra.mxu0 0.0
        %633 = vmatprep.subr.mxu0 0.0
        %634 = vmatpush1.xpose.msra.mxu0 0.0
        %635 = vmatprep.subr.mxu0 0.0
        %636 = vmatpush1.xpose.msra.mxu0 0.0
        %637 = vmatprep.subr.mxu0 0.0
        %638 = vmatpush1.xpose.msra.mxu0 0.0
        %639 = vmatprep.subr.mxu0 0.0
        %640 = vmatpush1.xpose.msra.mxu0 0.0
        %641 = vmatprep.subr.mxu0 0.0
        %642 = vmatpush1.xpose.msra.mxu0 0.0
        %643 = vmatprep.subr.mxu0 0.0
        %644 = vmatpush1.xpose.msra.mxu0 0.0
        %645 = vmatprep.mubr.f32.mxu0 0.0
        %646 = vmatmul.mubr.f32.gmra.mrb[0].mxu0 %v577
        %v647 = vpop.f32.mrb[0].mxu0
        %v648 = vadd.f32 0.0, %v647
        %v649 = vpop.f32.mrb[0].mxu0
        %650 = vdwg.mxu0
        %v651 = vsel %vm410, %v648, -inf
        %652 = vmax.xlane.f32.xlu0 %v651
        %v653 = vpop.xlane.xlu0 %652
        %v654 = vsub.f32 %v648, %v653
        %v655 = vmul.f32 %v654, 1.442695
        %v656 = vpow.pop %v655
        %v657 = vsel %vm410, %v656, 0.0
        %658 = vadd.xlane.f32.xlu0 %v657
        %v659 = vpop.xlane.xlu0 %658
        %660 = vrot.lane.b32.xlu0 %v404, 56
        %v661 = vpop.permute.xlu0 %660
        %v664 = vsel %vm410, %v656, 0
        %666 = vmatprep.subr.mxu0 0.0
        %667 = vmatpush1.msra.mxu0 %v661
        %668 = vmatprep.subr.mxu0 0.0
        %669 = vmatpush1.msra.mxu0 0.0
        %670 = vmatprep.subr.mxu0 0.0
        %671 = vmatpush1.msra.mxu0 0.0
        %672 = vmatprep.subr.mxu0 0.0
        %673 = vmatpush1.msra.mxu0 0.0
        %674 = vmatprep.subr.mxu0 0.0
        %675 = vmatpush1.msra.mxu0 0.0
        %676 = vmatprep.subr.mxu0 0.0
        %677 = vmatpush1.msra.mxu0 0.0
        %678 = vmatprep.subr.mxu0 0.0
        %679 = vmatpush1.msra.mxu0 0.0
        %680 = vmatprep.subr.mxu0 0.0
        %681 = vmatpush1.msra.mxu0 0.0
        %682 = vmatprep.subr.mxu0 0.0
        %683 = vmatpush1.msra.mxu0 0.0
        %684 = vmatprep.subr.mxu0 0.0
        %685 = vmatpush1.msra.mxu0 0.0
        %686 = vmatprep.subr.mxu0 0.0
        %687 = vmatpush1.msra.mxu0 0.0
        %688 = vmatprep.subr.mxu0 0.0
        %689 = vmatpush1.msra.mxu0 0.0
        %690 = vmatprep.subr.mxu0 0.0
        %691 = vmatpush1.msra.mxu0 0.0
        %692 = vmatprep.subr.mxu0 0.0
        %693 = vmatpush1.msra.mxu0 0.0
        %694 = vmatprep.subr.mxu0 0.0
        %695 = vmatpush1.msra.mxu0 0.0
        %696 = vmatprep.subr.mxu0 0.0
        %697 = vmatpush1.msra.mxu0 0.0
        %698 = vmatprep.subr.mxu0 0.0
        %699 = vmatpush1.msra.mxu0 0.0
        %700 = vmatprep.subr.mxu0 0.0
        %701 = vmatpush1.msra.mxu0 0.0
        %702 = vmatprep.subr.mxu0 0.0
        %703 = vmatpush1.msra.mxu0 0.0
        %704 = vmatprep.subr.mxu0 0.0
        %705 = vmatpush1.msra.mxu0 0.0
        %706 = vmatprep.subr.mxu0 0.0
        %707 = vmatpush1.msra.mxu0 0.0
        %708 = vmatprep.subr.mxu0 0.0
        %709 = vmatpush1.msra.mxu0 0.0
        %710 = vmatprep.subr.mxu0 0.0
        %711 = vmatpush1.msra.mxu0 0.0
        %712 = vmatprep.subr.mxu0 0.0
        %713 = vmatpush1.msra.mxu0 0.0
        %714 = vmatprep.subr.mxu0 0.0
        %715 = vmatpush1.msra.mxu0 0.0
        %716 = vmatprep.subr.mxu0 0.0
        %717 = vmatpush1.msra.mxu0 0.0
        %718 = vmatprep.subr.mxu0 0.0
        %719 = vmatpush1.msra.mxu0 0.0
        %720 = vmatprep.subr.mxu0 0.0
        %721 = vmatpush1.msra.mxu0 0.0
        %722 = vmatprep.subr.mxu0 0.0
        %723 = vmatpush1.msra.mxu0 0.0
        %724 = vmatprep.subr.mxu0 0.0
        %725 = vmatpush1.msra.mxu0 0.0
        %726 = vmatprep.subr.mxu0 0.0
        %727 = vmatpush1.msra.mxu0 0.0
        %728 = vmatprep.subr.mxu0 0.0
        %729 = vmatpush1.msra.mxu0 0.0
        %730 = vmatprep.mubr.f32.mxu0 0.0
        %731 = vmatmul.mubr.f32.gmra.mrb[0].mxu0 %v664
        %v732 = vpop.f32.mrb[0].mxu0
        %v733 = vadd.f32 0.0, %v732
        %v734 = vpop.f32.mrb[0].mxu0
        %735 = vdwg.mxu0
        %v736 = vrcp.pop %v659
        %v737 = vmul.f32 %v733, %v736
        %739 = vrot.lane.b32.xlu0 %v737, 8
        %v740 = vpop.permute.xlu0 %739
        %vm742 = vcmask 130112
        %743 = vst.msk [vmem:[#allocation2] sm:$0xff] %vm742, %v740
        %744 = vrot.lane.b32.xlu0 %v404, 112
        %v745 = vpop.permute.xlu0 %744
        %746 = vrot.lane.b32.xlu0 %v404, 80
        %v747 = vpop.permute.xlu0 %746
        %v748 = vsel %vm410, %v745, 0
        %v750 = vsel %vm410, %v747, 0
        %752 = vmatprep.subr.mxu0 0.0
        %753 = vmatpush1.xpose.msra.mxu0 %v750
        %754 = vmatprep.subr.mxu0 0.0
        %755 = vmatpush1.xpose.msra.mxu0 0.0
        %756 = vmatprep.subr.mxu0 0.0
        %757 = vmatpush1.xpose.msra.mxu0 0.0
        %758 = vmatprep.subr.mxu0 0.0
        %759 = vmatpush1.xpose.msra.mxu0 0.0
        %760 = vmatprep.subr.mxu0 0.0
        %761 = vmatpush1.xpose.msra.mxu0 0.0
        %762 = vmatprep.subr.mxu0 0.0
        %763 = vmatpush1.xpose.msra.mxu0 0.0
        %764 = vmatprep.subr.mxu0 0.0
        %765 = vmatpush1.xpose.msra.mxu0 0.0
        %766 = vmatprep.subr.mxu0 0.0
        %767 = vmatpush1.xpose.msra.mxu0 0.0
        %768 = vmatprep.subr.mxu0 0.0
        %769 = vmatpush1.xpose.msra.mxu0 0.0
        %770 = vmatprep.subr.mxu0 0.0
        %771 = vmatpush1.xpose.msra.mxu0 0.0
        %772 = vmatprep.subr.mxu0 0.0
        %773 = vmatpush1.xpose.msra.mxu0 0.0
        %774 = vmatprep.subr.mxu0 0.0
        %775 = vmatpush1.xpose.msra.mxu0 0.0
        %776 = vmatprep.subr.mxu0 0.0
        %777 = vmatpush1.xpose.msra.mxu0 0.0
        %778 = vmatprep.subr.mxu0 0.0
        %779 = vmatpush1.xpose.msra.mxu0 0.0
        %780 = vmatprep.subr.mxu0 0.0
        %781 = vmatpush1.xpose.msra.mxu0 0.0
        %782 = vmatprep.subr.mxu0 0.0
        %783 = vmatpush1.xpose.msra.mxu0 0.0
        %784 = vmatprep.subr.mxu0 0.0
        %785 = vmatpush1.xpose.msra.mxu0 0.0
        %786 = vmatprep.subr.mxu0 0.0
        %787 = vmatpush1.xpose.msra.mxu0 0.0
        %788 = vmatprep.subr.mxu0 0.0
        %789 = vmatpush1.xpose.msra.mxu0 0.0
        %790 = vmatprep.subr.mxu0 0.0
        %791 = vmatpush1.xpose.msra.mxu0 0.0
        %792 = vmatprep.subr.mxu0 0.0
        %793 = vmatpush1.xpose.msra.mxu0 0.0
        %794 = vmatprep.subr.mxu0 0.0
        %795 = vmatpush1.xpose.msra.mxu0 0.0
        %796 = vmatprep.subr.mxu0 0.0
        %797 = vmatpush1.xpose.msra.mxu0 0.0
        %798 = vmatprep.subr.mxu0 0.0
        %799 = vmatpush1.xpose.msra.mxu0 0.0
        %800 = vmatprep.subr.mxu0 0.0
        %801 = vmatpush1.xpose.msra.mxu0 0.0
        %802 = vmatprep.subr.mxu0 0.0
        %803 = vmatpush1.xpose.msra.mxu0 0.0
        %804 = vmatprep.subr.mxu0 0.0
        %805 = vmatpush1.xpose.msra.mxu0 0.0
        %806 = vmatprep.subr.mxu0 0.0
        %807 = vmatpush1.xpose.msra.mxu0 0.0
        %808 = vmatprep.subr.mxu0 0.0
        %809 = vmatpush1.xpose.msra.mxu0 0.0
        %810 = vmatprep.subr.mxu0 0.0
        %811 = vmatpush1.xpose.msra.mxu0 0.0
        %812 = vmatprep.subr.mxu0 0.0
        %813 = vmatpush1.xpose.msra.mxu0 0.0
        %814 = vmatprep.subr.mxu0 0.0
        %815 = vmatpush1.xpose.msra.mxu0 0.0
        %816 = vmatprep.mubr.f32.mxu0 0.0
        %817 = vmatmul.mubr.f32.gmra.mrb[0].mxu0 %v748
        %v818 = vpop.f32.mrb[0].mxu0
        %v819 = vadd.f32 0.0, %v818
        %v820 = vpop.f32.mrb[0].mxu0
        %821 = vdwg.mxu0
        %v822 = vsel %vm410, %v819, -inf
        %823 = vmax.xlane.f32.xlu0 %v822
        %v824 = vpop.xlane.xlu0 %823
        %v825 = vsub.f32 %v819, %v824
        %v826 = vmul.f32 %v825, 1.442695
        %v827 = vpow.pop %v826
        %v828 = vsel %vm410, %v827, 0.0
        %829 = vadd.xlane.f32.xlu0 %v828
        %v830 = vpop.xlane.xlu0 %829
        %831 = vrot.lane.b32.xlu0 %v404, 48
        %v832 = vpop.permute.xlu0 %831
        %v835 = vsel %vm410, %v827, 0
        %837 = vmatprep.subr.mxu0 0.0
        %838 = vmatpush1.msra.mxu0 %v832
        %839 = vmatprep.subr.mxu0 0.0
        %840 = vmatpush1.msra.mxu0 0.0
        %841 = vmatprep.subr.mxu0 0.0
        %842 = vmatpush1.msra.mxu0 0.0
        %843 = vmatprep.subr.mxu0 0.0
        %844 = vmatpush1.msra.mxu0 0.0
        %845 = vmatprep.subr.mxu0 0.0
        %846 = vmatpush1.msra.mxu0 0.0
        %847 = vmatprep.subr.mxu0 0.0
        %848 = vmatpush1.msra.mxu0 0.0
        %849 = vmatprep.subr.mxu0 0.0
        %850 = vmatpush1.msra.mxu0 0.0
        %851 = vmatprep.subr.mxu0 0.0
        %852 = vmatpush1.msra.mxu0 0.0
        %853 = vmatprep.subr.mxu0 0.0
        %854 = vmatpush1.msra.mxu0 0.0
        %855 = vmatprep.subr.mxu0 0.0
        %856 = vmatpush1.msra.mxu0 0.0
        %857 = vmatprep.subr.mxu0 0.0
        %858 = vmatpush1.msra.mxu0 0.0
        %859 = vmatprep.subr.mxu0 0.0
        %860 = vmatpush1.msra.mxu0 0.0
        %861 = vmatprep.subr.mxu0 0.0
        %862 = vmatpush1.msra.mxu0 0.0
        %863 = vmatprep.subr.mxu0 0.0
        %864 = vmatpush1.msra.mxu0 0.0
        %865 = vmatprep.subr.mxu0 0.0
        %866 = vmatpush1.msra.mxu0 0.0
        %867 = vmatprep.subr.mxu0 0.0
        %868 = vmatpush1.msra.mxu0 0.0
        %869 = vmatprep.subr.mxu0 0.0
        %870 = vmatpush1.msra.mxu0 0.0
        %871 = vmatprep.subr.mxu0 0.0
        %872 = vmatpush1.msra.mxu0 0.0
        %873 = vmatprep.subr.mxu0 0.0
        %874 = vmatpush1.msra.mxu0 0.0
        %875 = vmatprep.subr.mxu0 0.0
        %876 = vmatpush1.msra.mxu0 0.0
        %877 = vmatprep.subr.mxu0 0.0
        %878 = vmatpush1.msra.mxu0 0.0
        %879 = vmatprep.subr.mxu0 0.0
        %880 = vmatpush1.msra.mxu0 0.0
        %881 = vmatprep.subr.mxu0 0.0
        %882 = vmatpush1.msra.mxu0 0.0
        %883 = vmatprep.subr.mxu0 0.0
        %884 = vmatpush1.msra.mxu0 0.0
        %885 = vmatprep.subr.mxu0 0.0
        %886 = vmatpush1.msra.mxu0 0.0
        %887 = vmatprep.subr.mxu0 0.0
        %888 = vmatpush1.msra.mxu0 0.0
        %889 = vmatprep.subr.mxu0 0.0
        %890 = vmatpush1.msra.mxu0 0.0
        %891 = vmatprep.subr.mxu0 0.0
        %892 = vmatpush1.msra.mxu0 0.0
        %893 = vmatprep.subr.mxu0 0.0
        %894 = vmatpush1.msra.mxu0 0.0
        %895 = vmatprep.subr.mxu0 0.0
        %896 = vmatpush1.msra.mxu0 0.0
        %897 = vmatprep.subr.mxu0 0.0
        %898 = vmatpush1.msra.mxu0 0.0
        %899 = vmatprep.subr.mxu0 0.0
        %900 = vmatpush1.msra.mxu0 0.0
        %901 = vmatprep.mubr.f32.mxu0 0.0
        %902 = vmatmul.mubr.f32.gmra.mrb[0].mxu0 %v835
        %v903 = vpop.f32.mrb[0].mxu0
        %v904 = vadd.f32 0.0, %v903
        %v905 = vpop.f32.mrb[0].mxu0
        %906 = vdwg.mxu0
        %v907 = vrcp.pop %v830
        %v908 = vmul.f32 %v904, %v907
        %910 = vrot.lane.b32.xlu0 %v908, 16
        %v911 = vpop.permute.xlu0 %910
        %vm913 = vcmask 195712
        %914 = vst.msk [vmem:[#allocation2] sm:$0xff] %vm913, %v911
        %915 = vrot.lane.b32.xlu0 %v404, 104
        %v916 = vpop.permute.xlu0 %915
        %917 = vrot.lane.b32.xlu0 %v404, 72
        %v918 = vpop.permute.xlu0 %917
        %v919 = vsel %vm410, %v916, 0
        %v921 = vsel %vm410, %v918, 0
        %923 = vmatprep.subr.mxu0 0.0
        %924 = vmatpush1.xpose.msra.mxu0 %v921
        %925 = vmatprep.subr.mxu0 0.0
        %926 = vmatpush1.xpose.msra.mxu0 0.0
        %927 = vmatprep.subr.mxu0 0.0
        %928 = vmatpush1.xpose.msra.mxu0 0.0
        %929 = vmatprep.subr.mxu0 0.0
        %930 = vmatpush1.xpose.msra.mxu0 0.0
        %931 = vmatprep.subr.mxu0 0.0
        %932 = vmatpush1.xpose.msra.mxu0 0.0
        %933 = vmatprep.subr.mxu0 0.0
        %934 = vmatpush1.xpose.msra.mxu0 0.0
        %935 = vmatprep.subr.mxu0 0.0
        %936 = vmatpush1.xpose.msra.mxu0 0.0
        %937 = vmatprep.subr.mxu0 0.0
        %938 = vmatpush1.xpose.msra.mxu0 0.0
        %939 = vmatprep.subr.mxu0 0.0
        %940 = vmatpush1.xpose.msra.mxu0 0.0
        %941 = vmatprep.subr.mxu0 0.0
        %942 = vmatpush1.xpose.msra.mxu0 0.0
        %943 = vmatprep.subr.mxu0 0.0
        %944 = vmatpush1.xpose.msra.mxu0 0.0
        %945 = vmatprep.subr.mxu0 0.0
        %946 = vmatpush1.xpose.msra.mxu0 0.0
        %947 = vmatprep.subr.mxu0 0.0
        %948 = vmatpush1.xpose.msra.mxu0 0.0
        %949 = vmatprep.subr.mxu0 0.0
        %950 = vmatpush1.xpose.msra.mxu0 0.0
        %951 = vmatprep.subr.mxu0 0.0
        %952 = vmatpush1.xpose.msra.mxu0 0.0
        %953 = vmatprep.subr.mxu0 0.0
        %954 = vmatpush1.xpose.msra.mxu0 0.0
        %955 = vmatprep.subr.mxu0 0.0
        %956 = vmatpush1.xpose.msra.mxu0 0.0
        %957 = vmatprep.subr.mxu0 0.0
        %958 = vmatpush1.xpose.msra.mxu0 0.0
        %959 = vmatprep.subr.mxu0 0.0
        %960 = vmatpush1.xpose.msra.mxu0 0.0
        %961 = vmatprep.subr.mxu0 0.0
        %962 = vmatpush1.xpose.msra.mxu0 0.0
        %963 = vmatprep.subr.mxu0 0.0
        %964 = vmatpush1.xpose.msra.mxu0 0.0
        %965 = vmatprep.subr.mxu0 0.0
        %966 = vmatpush1.xpose.msra.mxu0 0.0
        %967 = vmatprep.subr.mxu0 0.0
        %968 = vmatpush1.xpose.msra.mxu0 0.0
        %969 = vmatprep.subr.mxu0 0.0
        %970 = vmatpush1.xpose.msra.mxu0 0.0
        %971 = vmatprep.subr.mxu0 0.0
        %972 = vmatpush1.xpose.msra.mxu0 0.0
        %973 = vmatprep.subr.mxu0 0.0
        %974 = vmatpush1.xpose.msra.mxu0 0.0
        %975 = vmatprep.subr.mxu0 0.0
        %976 = vmatpush1.xpose.msra.mxu0 0.0
        %977 = vmatprep.subr.mxu0 0.0
        %978 = vmatpush1.xpose.msra.mxu0 0.0
        %979 = vmatprep.subr.mxu0 0.0
        %980 = vmatpush1.xpose.msra.mxu0 0.0
        %981 = vmatprep.subr.mxu0 0.0
        %982 = vmatpush1.xpose.msra.mxu0 0.0
        %983 = vmatprep.subr.mxu0 0.0
        %984 = vmatpush1.xpose.msra.mxu0 0.0
        %985 = vmatprep.subr.mxu0 0.0
        %986 = vmatpush1.xpose.msra.mxu0 0.0
        %987 = vmatprep.mubr.f32.mxu0 0.0
        %988 = vmatmul.mubr.f32.gmra.mrb[0].mxu0 %v919
        %v989 = vpop.f32.mrb[0].mxu0
        %v990 = vadd.f32 0.0, %v989
        %v991 = vpop.f32.mrb[0].mxu0
        %992 = vdwg.mxu0
        %v993 = vsel %vm410, %v990, -inf
        %994 = vmax.xlane.f32.xlu0 %v993
        %v995 = vpop.xlane.xlu0 %994
        %v996 = vsub.f32 %v990, %v995
        %v997 = vmul.f32 %v996, 1.442695
        %v998 = vpow.pop %v997
        %v999 = vsel %vm410, %v998, 0.0
        %1000 = vadd.xlane.f32.xlu0 %v999
        %v1001 = vpop.xlane.xlu0 %1000
        %1002 = vrot.lane.b32.xlu0 %v404, 40
        %v1003 = vpop.permute.xlu0 %1002
        %v1006 = vsel %vm410, %v998, 0
        %1008 = vmatprep.subr.mxu0 0.0
        %1009 = vmatpush1.msra.mxu0 %v1003
        %1010 = vmatprep.subr.mxu0 0.0
        %1011 = vmatpush1.msra.mxu0 0.0
        %1012 = vmatprep.subr.mxu0 0.0
        %1013 = vmatpush1.msra.mxu0 0.0
        %1014 = vmatprep.subr.mxu0 0.0
        %1015 = vmatpush1.msra.mxu0 0.0
        %1016 = vmatprep.subr.mxu0 0.0
        %1017 = vmatpush1.msra.mxu0 0.0
        %1018 = vmatprep.subr.mxu0 0.0
        %1019 = vmatpush1.msra.mxu0 0.0
        %1020 = vmatprep.subr.mxu0 0.0
        %1021 = vmatpush1.msra.mxu0 0.0
        %1022 = vmatprep.subr.mxu0 0.0
        %1023 = vmatpush1.msra.mxu0 0.0
        %1024 = vmatprep.subr.mxu0 0.0
        %1025 = vmatpush1.msra.mxu0 0.0
        %1026 = vmatprep.subr.mxu0 0.0
        %1027 = vmatpush1.msra.mxu0 0.0
        %1028 = vmatprep.subr.mxu0 0.0
        %1029 = vmatpush1.msra.mxu0 0.0
        %1030 = vmatprep.subr.mxu0 0.0
        %1031 = vmatpush1.msra.mxu0 0.0
        %1032 = vmatprep.subr.mxu0 0.0
        %1033 = vmatpush1.msra.mxu0 0.0
        %1034 = vmatprep.subr.mxu0 0.0
        %1035 = vmatpush1.msra.mxu0 0.0
        %1036 = vmatprep.subr.mxu0 0.0
        %1037 = vmatpush1.msra.mxu0 0.0
        %1038 = vmatprep.subr.mxu0 0.0
        %1039 = vmatpush1.msra.mxu0 0.0
        %1040 = vmatprep.subr.mxu0 0.0
        %1041 = vmatpush1.msra.mxu0 0.0
        %1042 = vmatprep.subr.mxu0 0.0
        %1043 = vmatpush1.msra.mxu0 0.0
        %1044 = vmatprep.subr.mxu0 0.0
        %1045 = vmatpush1.msra.mxu0 0.0
        %1046 = vmatprep.subr.mxu0 0.0
        %1047 = vmatpush1.msra.mxu0 0.0
        %1048 = vmatprep.subr.mxu0 0.0
        %1049 = vmatpush1.msra.mxu0 0.0
        %1050 = vmatprep.subr.mxu0 0.0
        %1051 = vmatpush1.msra.mxu0 0.0
        %1052 = vmatprep.subr.mxu0 0.0
        %1053 = vmatpush1.msra.mxu0 0.0
        %1054 = vmatprep.subr.mxu0 0.0
        %1055 = vmatpush1.msra.mxu0 0.0
        %1056 = vmatprep.subr.mxu0 0.0
        %1057 = vmatpush1.msra.mxu0 0.0
        %1058 = vmatprep.subr.mxu0 0.0
        %1059 = vmatpush1.msra.mxu0 0.0
        %1060 = vmatprep.subr.mxu0 0.0
        %1061 = vmatpush1.msra.mxu0 0.0
        %1062 = vmatprep.subr.mxu0 0.0
        %1063 = vmatpush1.msra.mxu0 0.0
        %1064 = vmatprep.subr.mxu0 0.0
        %1065 = vmatpush1.msra.mxu0 0.0
        %1066 = vmatprep.subr.mxu0 0.0
        %1067 = vmatpush1.msra.mxu0 0.0
        %1068 = vmatprep.subr.mxu0 0.0
        %1069 = vmatpush1.msra.mxu0 0.0
        %1070 = vmatprep.subr.mxu0 0.0
        %1071 = vmatpush1.msra.mxu0 0.0
        %1072 = vmatprep.mubr.f32.mxu0 0.0
        %1073 = vmatmul.mubr.f32.gmra.mrb[0].mxu0 %v1006
        %v1074 = vpop.f32.mrb[0].mxu0
        %v1075 = vadd.f32 0.0, %v1074
        %v1076 = vpop.f32.mrb[0].mxu0
        %1077 = vdwg.mxu0
        %v1078 = vrcp.pop %v1001
        %v1079 = vmul.f32 %v1075, %v1078
        %1081 = vrot.lane.b32.xlu0 %v1079, 24
        %v1082 = vpop.permute.xlu0 %1081
        %vm1084 = vcmask 261312
        %1085 = vst.msk [vmem:[#allocation2] sm:$0xff] %vm1084, %v1082
        %v1086 = vld [vmem:[#allocation2] sm:$0xff]
        %v1087 = vld [vmem:[%s3] sm:$0xff]
        %v1088 = vld [vmem:[%s3 + $0x8] sm:$0xff]
        %v1089 = vld [vmem:[%s3 + $0x10] sm:$0xff]
        %v1090 = vld [vmem:[%s3 + $0x18] sm:$0xff]
        %v1091 = vld [vmem:[%s7] sm:$0x1]
        %v1092 = vlaneseq
        %v1093 = vshrl.u32 %v1092, 7
        %v1094 = vsub.s32 0, %v1093
        %v1095 = vrot.slane %v1091, %v1094
        %v1097 = vsel %vm333, %v1086, 0
        %1099 = vmatprep.subr.mxu0 0.0
        %1100 = vmatpush1.msra.mxu0 %v1087
        %1101 = vmatprep.subr.mxu0 0.0
        %1102 = vmatpush1.msra.mxu0 %v1088
        %1103 = vmatprep.subr.mxu0 0.0
        %1104 = vmatpush1.msra.mxu0 %v1089
        %1105 = vmatprep.subr.mxu0 0.0
        %1106 = vmatpush1.msra.mxu0 %v1090
        %1107 = vmatprep.subr.mxu0 0.0
        %1108 = vmatpush1.msra.mxu0 0.0
        %1109 = vmatprep.subr.mxu0 0.0
        %1110 = vmatpush1.msra.mxu0 0.0
        %1111 = vmatprep.subr.mxu0 0.0
        %1112 = vmatpush1.msra.mxu0 0.0
        %1113 = vmatprep.subr.mxu0 0.0
        %1114 = vmatpush1.msra.mxu0 0.0
        %1115 = vmatprep.subr.mxu0 0.0
        %1116 = vmatpush1.msra.mxu0 0.0
        %1117 = vmatprep.subr.mxu0 0.0
        %1118 = vmatpush1.msra.mxu0 0.0
        %1119 = vmatprep.subr.mxu0 0.0
        %1120 = vmatpush1.msra.mxu0 0.0
        %1121 = vmatprep.subr.mxu0 0.0
        %1122 = vmatpush1.msra.mxu0 0.0
        %1123 = vmatprep.subr.mxu0 0.0
        %1124 = vmatpush1.msra.mxu0 0.0
        %1125 = vmatprep.subr.mxu0 0.0
        %1126 = vmatpush1.msra.mxu0 0.0
        %1127 = vmatprep.subr.mxu0 0.0
        %1128 = vmatpush1.msra.mxu0 0.0
        %1129 = vmatprep.subr.mxu0 0.0
        %1130 = vmatpush1.msra.mxu0 0.0
        %1131 = vmatprep.subr.mxu0 0.0
        %1132 = vmatpush1.msra.mxu0 0.0
        %1133 = vmatprep.subr.mxu0 0.0
        %1134 = vmatpush1.msra.mxu0 0.0
        %1135 = vmatprep.subr.mxu0 0.0
        %1136 = vmatpush1.msra.mxu0 0.0
        %1137 = vmatprep.subr.mxu0 0.0
        %1138 = vmatpush1.msra.mxu0 0.0
        %1139 = vmatprep.subr.mxu0 0.0
        %1140 = vmatpush1.msra.mxu0 0.0
        %1141 = vmatprep.subr.mxu0 0.0
        %1142 = vmatpush1.msra.mxu0 0.0
        %1143 = vmatprep.subr.mxu0 0.0
        %1144 = vmatpush1.msra.mxu0 0.0
        %1145 = vmatprep.subr.mxu0 0.0
        %1146 = vmatpush1.msra.mxu0 0.0
        %1147 = vmatprep.subr.mxu0 0.0
        %1148 = vmatpush1.msra.mxu0 0.0
        %1149 = vmatprep.subr.mxu0 0.0
        %1150 = vmatpush1.msra.mxu0 0.0
        %1151 = vmatprep.subr.mxu0 0.0
        %1152 = vmatpush1.msra.mxu0 0.0
        %1153 = vmatprep.subr.mxu0 0.0
        %1154 = vmatpush1.msra.mxu0 0.0
        %1155 = vmatprep.subr.mxu0 0.0
        %1156 = vmatpush1.msra.mxu0 0.0
        %1157 = vmatprep.subr.mxu0 0.0
        %1158 = vmatpush1.msra.mxu0 0.0
        %1159 = vmatprep.subr.mxu0 0.0
        %1160 = vmatpush1.msra.mxu0 0.0
        %1161 = vmatprep.subr.mxu0 0.0
        %1162 = vmatpush1.msra.mxu0 0.0
        %1163 = vmatprep.mubr.f32.mxu0 0.0
        %1164 = vmatmul.mubr.f32.gmra.mrb[0].mxu0 %v1097
        %v1165 = vpop.f32.mrb[0].mxu0
        %v1166 = vadd.f32 %v1095, %v1165
        %v1167 = vpop.f32.mrb[0].mxu0
        %1168 = vdwg.mxu0
        %v1169 = vadd.f32 %v321, %v1166
        %v1170 = vld [vmem:[%s7 + $0x1] sm:$0x1]
        %v1171 = vld [vmem:[%s7 + $0x2] sm:$0x1]
        %v1172 = vsel %vm333, %v1169, 0.0
        %1173 = vadd.xlane.f32.xlu0 %v1172
        %v1174 = vpop.xlane.xlu0 %1173
        %v1175 = vrcp.pop 32.0
        %v1176 = vmul.f32 %v1174, %v1175
        %v1177 = vsub.f32 %v1169, %v1176
        %v1178 = vmul.f32 %v1177, %v1177
        %v1179 = vsel %vm333, %v1178, 0.0
        %1180 = vadd.xlane.f32.xlu0 %v1179
        %v1181 = vpop.xlane.xlu0 %1180
        %v1182 = vmul.f32 %v1181, %v1175
        %v1183 = vadd.f32 %v1182, 1e-05
        %v1184 = vrsqrt.pop %v1183
        %v1185 = vmul.f32 %v1177, %v1184
        %v1186 = vlaneseq
        %v1187 = vshrl.u32 %v1186, 7
        %v1188 = vsub.s32 0, %v1187
        %v1189 = vrot.slane %v1170, %v1188
        %v1190 = vmul.f32 %v1185, %v1189
        %v1191 = vlaneseq
        %v1192 = vshrl.u32 %v1191, 7
        %v1193 = vsub.s32 0, %v1192
        %v1194 = vrot.slane %v1171, %v1193
        %v1195 = vadd.f32 %v1190, %v1194
        %v1196 = vld [vmem:[%s4] sm:$0xff]
        %v1197 = vld [vmem:[%s4 + $0x8] sm:$0xff]
        %v1198 = vld [vmem:[%s4 + $0x10] sm:$0xff]
        %v1199 = vld [vmem:[%s4 + $0x18] sm:$0xff]
        %v1200 = vld [vmem:[%s5] sm:$0x1]
        %v1202 = vlaneseq
        %v1203 = vshrl.u32 %v1202, 7
        %v1204 = vsub.s32 0, %v1203
        %v1205 = vrot.slane %v1200, %v1204
        %v1208 = vsel %vm333, %v1195, 0
        %1210 = vmatprep.subr.mxu0 0.0
        %1211 = vmatpush1.msra.mxu0 %v1196
        %1212 = vmatprep.subr.mxu0 0.0
        %1213 = vmatpush1.msra.mxu0 %v1197
        %1214 = vmatprep.subr.mxu0 0.0
        %1215 = vmatpush1.msra.mxu0 %v1198
        %1216 = vmatprep.subr.mxu0 0.0
        %1217 = vmatpush1.msra.mxu0 %v1199
        %1218 = vmatprep.subr.mxu0 0.0
        %1219 = vmatpush1.msra.mxu0 0.0
        %1220 = vmatprep.subr.mxu0 0.0
        %1221 = vmatpush1.msra.mxu0 0.0
        %1222 = vmatprep.subr.mxu0 0.0
        %1223 = vmatpush1.msra.mxu0 0.0
        %1224 = vmatprep.subr.mxu0 0.0
        %1225 = vmatpush1.msra.mxu0 0.0
        %1226 = vmatprep.subr.mxu0 0.0
        %1227 = vmatpush1.msra.mxu0 0.0
        %1228 = vmatprep.subr.mxu0 0.0
        %1229 = vmatpush1.msra.mxu0 0.0
        %1230 = vmatprep.subr.mxu0 0.0
        %1231 = vmatpush1.msra.mxu0 0.0
        %1232 = vmatprep.subr.mxu0 0.0
        %1233 = vmatpush1.msra.mxu0 0.0
        %1234 = vmatprep.subr.mxu0 0.0
        %1235 = vmatpush1.msra.mxu0 0.0
        %1236 = vmatprep.subr.mxu0 0.0
        %1237 = vmatpush1.msra.mxu0 0.0
        %1238 = vmatprep.subr.mxu0 0.0
        %1239 = vmatpush1.msra.mxu0 0.0
        %1240 = vmatprep.subr.mxu0 0.0
        %1241 = vmatpush1.msra.mxu0 0.0
        %1242 = vmatprep.subr.mxu0 0.0
        %1243 = vmatpush1.msra.mxu0 0.0
        %1244 = vmatprep.subr.mxu0 0.0
        %1245 = vmatpush1.msra.mxu0 0.0
        %1246 = vmatprep.subr.mxu0 0.0
        %1247 = vmatpush1.msra.mxu0 0.0
        %1248 = vmatprep.subr.mxu0 0.0
        %1249 = vmatpush1.msra.mxu0 0.0
        %1250 = vmatprep.subr.mxu0 0.0
        %1251 = vmatpush1.msra.mxu0 0.0
        %1252 = vmatprep.subr.mxu0 0.0
        %1253 = vmatpush1.msra.mxu0 0.0
        %1254 = vmatprep.subr.mxu0 0.0
        %1255 = vmatpush1.msra.mxu0 0.0
        %1256 = vmatprep.subr.mxu0 0.0
        %1257 = vmatpush1.msra.mxu0 0.0
        %1258 = vmatprep.subr.mxu0 0.0
        %1259 = vmatpush1.msra.mxu0 0.0
        %1260 = vmatprep.subr.mxu0 0.0
        %1261 = vmatpush1.msra.mxu0 0.0
        %1262 = vmatprep.subr.mxu0 0.0
        %1263 = vmatpush1.msra.mxu0 0.0
        %1264 = vmatprep.subr.mxu0 0.0
        %1265 = vmatpush1.msra.mxu0 0.0
        %1266 = vmatprep.subr.mxu0 0.0
        %1267 = vmatpush1.msra.mxu0 0.0
        %1268 = vmatprep.subr.mxu0 0.0
        %1269 = vmatpush1.msra.mxu0 0.0
        %1270 = vmatprep.subr.mxu0 0.0
        %1271 = vmatpush1.msra.mxu0 0.0
        %1272 = vmatprep.subr.mxu0 0.0
        %1273 = vmatpush1.msra.mxu0 0.0
        %1274 = vmatprep.mubr.f32.mxu0 0.0
        %1275 = vmatmul.mubr.f32.gmra.mrb[0].mxu0 %v1208
        %v1276 = vpop.f32.mrb[0].mxu0
        %v1277 = vadd.f32 %v1205, %v1276
        %v1278 = vpop.f32.mrb[0].mxu0
        %1279 = vdwg.mxu0
        %v1280 = vmul.f32 %v1277, 0.5
        %v1281 = vmul.f32 %v1277, 0.70710677
        %v1282 = verf.f32.pop %v1281
        %v1283 = vadd.f32 %v1282, 1.0
        %v1284 = vmul.f32 %v1280, %v1283
        %v1285 = vld [vmem:[%s6] sm:$0xff]
        %v1286 = vld [vmem:[%s6 + $0x8] sm:$0xff]
        %v1287 = vld [vmem:[%s6 + $0x10] sm:$0xff]
        %v1288 = vld [vmem:[%s6 + $0x18] sm:$0xff]
        %v1289 = vld [vmem:[%s6 + $0x20] sm:$0xff]
        %v1290 = vld [vmem:[%s6 + $0x28] sm:$0xff]
        %v1291 = vld [vmem:[%s6 + $0x30] sm:$0xff]
        %v1292 = vld [vmem:[%s6 + $0x38] sm:$0xff]
        %v1293 = vld [vmem:[%s7 + $0x3] sm:$0x1]
        %v1294 = vlaneseq
        %v1295 = vshrl.u32 %v1294, 7
        %v1296 = vsub.s32 0, %v1295
        %v1297 = vrot.slane %v1293, %v1296
        %vm1298 = vcmask 523264
        %v1300 = vsel %vm1298, %v1284, 0
        %1302 = vmatprep.subr.mxu0 0.0
        %1303 = vmatpush1.msra.mxu0 %v1285
        %1304 = vmatprep.subr.mxu0 0.0
        %1305 = vmatpush1.msra.mxu0 %v1286
        %1306 = vmatprep.subr.mxu0 0.0
        %1307 = vmatpush1.msra.mxu0 %v1287
        %1308 = vmatprep.subr.mxu0 0.0
        %1309 = vmatpush1.msra.mxu0 %v1288
        %1310 = vmatprep.subr.mxu0 0.0
        %1311 = vmatpush1.msra.mxu0 %v1289
        %1312 = vmatprep.subr.mxu0 0.0
        %1313 = vmatpush1.msra.mxu0 %v1290
        %1314 = vmatprep.subr.mxu0 0.0
        %1315 = vmatpush1.msra.mxu0 %v1291
        %1316 = vmatprep.subr.mxu0 0.0
        %1317 = vmatpush1.msra.mxu0 %v1292
        %1318 = vmatprep.subr.mxu0 0.0
        %1319 = vmatpush1.msra.mxu0 0.0
        %1320 = vmatprep.subr.mxu0 0.0
        %1321 = vmatpush1.msra.mxu0 0.0
        %1322 = vmatprep.subr.mxu0 0.0
        %1323 = vmatpush1.msra.mxu0 0.0
        %1324 = vmatprep.subr.mxu0 0.0
        %1325 = vmatpush1.msra.mxu0 0.0
        %1326 = vmatprep.subr.mxu0 0.0
        %1327 = vmatpush1.msra.mxu0 0.0
        %1328 = vmatprep.subr.mxu0 0.0
        %1329 = vmatpush1.msra.mxu0 0.0
        %1330 = vmatprep.subr.mxu0 0.0
        %1331 = vmatpush1.msra.mxu0 0.0
        %1332 = vmatprep.subr.mxu0 0.0
        %1333 = vmatpush1.msra.mxu0 0.0
        %1334 = vmatprep.subr.mxu0 0.0
        %1335 = vmatpush1.msra.mxu0 0.0
        %1336 = vmatprep.subr.mxu0 0.0
        %1337 = vmatpush1.msra.mxu0 0.0
        %1338 = vmatprep.subr.mxu0 0.0
        %1339 = vmatpush1.msra.mxu0 0.0
        %1340 = vmatprep.subr.mxu0 0.0
        %1341 = vmatpush1.msra.mxu0 0.0
        %1342 = vmatprep.subr.mxu0 0.0
        %1343 = vmatpush1.msra.mxu0 0.0
        %1344 = vmatprep.subr.mxu0 0.0
        %1345 = vmatpush1.msra.mxu0 0.0
        %1346 = vmatprep.subr.mxu0 0.0
        %1347 = vmatpush1.msra.mxu0 0.0
        %1348 = vmatprep.subr.mxu0 0.0
        %1349 = vmatpush1.msra.mxu0 0.0
        %1350 = vmatprep.subr.mxu0 0.0
        %1351 = vmatpush1.msra.mxu0 0.0
        %1352 = vmatprep.subr.mxu0 0.0
        %1353 = vmatpush1.msra.mxu0 0.0
        %1354 = vmatprep.subr.mxu0 0.0
        %1355 = vmatpush1.msra.mxu0 0.0
        %1356 = vmatprep.subr.mxu0 0.0
        %1357 = vmatpush1.msra.mxu0 0.0
        %1358 = vmatprep.subr.mxu0 0.0
        %1359 = vmatpush1.msra.mxu0 0.0
        %1360 = vmatprep.subr.mxu0 0.0
        %1361 = vmatpush1.msra.mxu0 0.0
        %1362 = vmatprep.subr.mxu0 0.0
        %1363 = vmatpush1.msra.mxu0 0.0
        %1364 = vmatprep.subr.mxu0 0.0
        %1365 = vmatpush1.msra.mxu0 0.0
        %1366 = vmatprep.mubr.f32.mxu0 0.0
        %1367 = vmatmul.mubr.f32.gmra.mrb[0].mxu0 %v1300
        %v1368 = vpop.f32.mrb[0].mxu0
        %v1369 = vadd.f32 %v1297, %v1368
        %v1370 = vpop.f32.mrb[0].mxu0
        %1371 = vdwg.mxu0
        %v1372 = vadd.f32 %v1195, %v1369
        %v1373 = vld [vmem:[%s7 + $0x4] sm:$0x1]
        %v1374 = vld [vmem:[%s7 + $0x5] sm:$0x1]
        %v1375 = vsel %vm333, %v1372, 0.0
        %1376 = vadd.xlane.f32.xlu0 %v1375
        %v1377 = vpop.xlane.xlu0 %1376
        %v1378 = vmul.f32 %v1377, %v1175
        %v1379 = vsub.f32 %v1372, %v1378
        %v1380 = vmul.f32 %v1379, %v1379
        %v1381 = vsel %vm333, %v1380, 0.0
        %1382 = vadd.xlane.f32.xlu0 %v1381
        %v1383 = vpop.xlane.xlu0 %1382
        %v1384 = vmul.f32 %v1383, %v1175
        %v1385 = vadd.f32 %v1384, 1e-05
        %v1386 = vrsqrt.pop %v1385
        %v1387 = vmul.f32 %v1379, %v1386
        %v1388 = vlaneseq
        %v1389 = vshrl.u32 %v1388, 7
        %v1390 = vsub.s32 0, %v1389
        %v1391 = vrot.slane %v1373, %v1390
        %v1392 = vmul.f32 %v1387, %v1391
        %v1393 = vlaneseq
        %v1394 = vshrl.u32 %v1393, 7
        %v1395 = vsub.s32 0, %v1394
        %v1396 = vrot.slane %v1374, %v1395
        %v1397 = vadd.f32 %v1392, %v1396
        %1398 = vst.msk [vmem:[%s320] sm:$0xff] %vm333, %v1397
        %s1399 = sand.u32 %s206, 1
        %s1400 = scalar_lea.sflag [#allocation5], %s1399
        %s1401 = sand.u32 %s206, 1
        %s1402 = smul.addr %s1401, 8
        %s1403 = scalar_lea.vmem [#allocation6], %s1402
        // Predicated region
        $region57: #{tpu_custom_call.1} parent=51 // pred_check
          %p1404 = pneg %p216
        $region58: #{tpu_custom_call.1} parent=51 // pred_check_branch
          %1406 = sbr.rel (%p1404) target = $region60
        $region59: #{tpu_custom_call.1} parent=51 // pred_region
          %s1408 = ssub.s32 128, 128
          %1409 = vsyncadd %s1400, %s1408
          %s1410 = smul.addr %s25, 128
          %s1411 = scalar_lea.hbm %s8, %s1410
          %s1413 = sshll.u32 %s1403, 4
          %s1414 = int_to_ptr.vmem [resolvable:$true] %s1413
          %1416 = dma.vmem_to_hbm [thread:$0]  %s1414, 128, %s1411, %s1400
        $region60: #{tpu_custom_call.1} parent=51 // pred_fallthru
          _
      $region52: #{tpu_custom_call.1} parent=5 // pred_fallthru
        _
      %p1417 = scmp.le.s32.totalorder 2, %s20
      // Predicated region
      $region61: #{tpu_custom_call.1} parent=5 // pred_check
        %p1418 = pneg %p1417
      $region62: #{tpu_custom_call.1} parent=5 // pred_check_branch
        %1420 = sbr.rel (%p1418) target = $region64
      $region63: #{tpu_custom_call.1} parent=5 // pred_region
        %s1421 = ssub.s32 %s20, 2
        // Predicated region
        $region65: #{tpu_custom_call.1} parent=63 // pred_check
          %p1422 = pneg %p222
        $region66: #{tpu_custom_call.1} parent=63 // pred_check_branch
          %1424 = sbr.rel (%p1422) target = $region68
        $region67: #{tpu_custom_call.1} parent=63 // pred_region
          %s1425 = sand.u32 %s207, 1
          %s1426 = scalar_lea.sflag [#allocation5], %s1425
          %s1427 = sand.u32 %s207, 1
          %s1428 = smul.addr %s1427, 8
          %s1429 = scalar_lea.vmem [#allocation6], %s1428
          %1430 = dma.done %s1426, 128
        $region68: #{tpu_custom_call.1} parent=63 // pred_fallthru
          _
      $region64: #{tpu_custom_call.1} parent=5 // pred_fallthru
        _
    $region6: #{tpu_custom_call.1} parent=1 // loop_footer
      %s24 = sadd.s32 1, %s20
    $region7: #{tpu_custom_call.1} parent=1 // loop_footer_branch
      %19 = sbr.rel target = $region3
    $region8: #{tpu_custom_call.1} parent=1 // loop_exit
      _
    %1431 = vsyncpa [#allocation4], 1
    %s1432 = scalar_lea.sflag [#allocation4], 1
    %1433 = vsyncpa %s1432, 1
    %1434 = vsyncpa [#allocation5], 1
    %s1435 = scalar_lea.sflag [#allocation5], 1
    %1436 = vsyncpa %s1435, 1

</llo_original>
